<compile_context>
chip_gen: v5e
topology: v5e:2x2
jax: 0.10.0
libtpu: 0.0.40
codegen_flags: <defaults>
</compile_context>

<pallas_src>
import functools
import math

import jax
import jax.numpy as jnp
import numpy as np
from jax.experimental import pallas as pl
from jax.experimental.pallas import tpu as pltpu

# ---- model hyper-parameters (match WeatherPredictor defaults) -----------------
EMBED_DIM = 2          # conv out-channels / d_model
NHEAD = 2              # nhead = embed_dim
HEAD_DIM = EMBED_DIM // NHEAD   # == 1  -> attention scale == 1.0
KERNEL_SIZE = 8        # Conv1d kernel size
CIN = 3                # Conv1d in-channels
DIM_FF = 2048          # TransformerDecoderLayer default dim_feedforward
LAYER_SIZE = 8
NUM_CLASSES = 13
LN_EPS = 1e-5
NEG_INF = -1e30        # large-negative causal mask (same effect as -inf)

KC = KERNEL_SIZE * CIN                 # 24 : im2col'd conv row width
ACT_W = KC + LAYER_SIZE + EMBED_DIM    # 34 : xcol | t_emb | (pos-enc + conv bias)

# ---- packed small-parameter buffer layout (rows of a [32, 32] f32 array) -------
PK_W = 32
PK_ROWS = 32
R_L2W = 0        # [8, 8]   linear2 weight rows for the 8 `y` features
R_CW = 8         # [2, 24]  conv weight, lane-dense [out_ch, K*CIN]
R_L1W = 10       # [2, 8]   linear1 weight, [in, out]
R_L3W = 12       # [2, 8]   linear3 weight, [out, in] (lane-dense K)
R_SAW = 14       # [2, 6]   self-attn in_proj, [in, q|k|v]
R_SAOW = 16      # [2, 2]   self-attn out_proj, [in, out]
R_SAB = 18       # [1, 6]
R_SAOB = 19      # [1, 2]
R_CA = 20        # [1, 2]   folded cross-attention constant
R_LN1W, R_LN1B = 21, 22
R_LN2W, R_LN2B = 23, 24
R_LN3W, R_LN3B = 25, 26
R_F2B = 27       # [1, 2]
R_L1B = 28       # [1, 8]
R_L2B = 29       # [1, 8]
R_L3B = 30       # [1, 2]


# ---- small in-kernel math helpers (everything stays >= 2-D) ---------------------
def _fma_linear(h, w, b):
    """h @ w + b for SMALL static K via K broadcast-FMAs on the VPU.
    h: [N, K], w: [K, M] (M lane-dense), b: [1, M] or [N, M]."""
    out = b
    for c in range(w.shape[0]):
        out = out + h[:, c:c + 1] * w[c:c + 1, :]
    return out


def _reduce_linear(h, w_t, b):
    """h @ w_t.T + b for SMALL static M via M lane reductions (XLU).
    h: [N, K], w_t: [M, K] (K lane-dense), b: [1, M] or [N, M]."""
    cols = [jnp.sum(h * w_t[m:m + 1, :], axis=-1, keepdims=True)
            for m in range(w_t.shape[0])]
    return jnp.concatenate(cols, axis=-1) + b


def _layernorm2(h, w, b):
    """Closed-form LayerNorm over a size-2 channel axis (no XLU reductions):
    d = (c0-c1)/2 is +/- the deviation, var = d*d."""
    d = (h[:, 0:1] - h[:, 1:2]) * 0.5
    r = d * jax.lax.rsqrt(d * d + LN_EPS)
    return jnp.concatenate([r, -r], axis=-1) * w + b


# ---- Pallas kernel --------------------------------------------------------------
def weather_kernel(act_ref, ffp_ref, pk_ref, out_ref, *, batch, length):
    B, L = batch, length
    N = B * L
    E = EMBED_DIM
    H = LAYER_SIZE

    def prow(r, w):                      # one packed-parameter row -> [1, w]
        return pk_ref[r:r + 1, 0:w]

    # --- Conv1d (im2col done in the wrapper) + positional encoding --------------
    xcol = act_ref[:, 0:KC]                                   # [N, 24]
    t_emb = act_ref[:, KC:KC + H]                             # [N, 8]  one_hot(t) @ l2w[8:]
    pb = act_ref[:, KC + H:ACT_W]                             # [N, 2]  pos-enc + conv bias
    hb = _reduce_linear(xcol, pk_ref[R_CW:R_CW + E, 0:KC], pb)          # [N, 2]

    # --- causal mask (batch/head invariant; built once) --------------------------
    rows = jax.lax.broadcasted_iota(jnp.int32, (L, L), 0)
    cols = jax.lax.broadcasted_iota(jnp.int32, (L, L), 1)
    mask = jnp.where(cols > rows, jnp.float32(NEG_INF), jnp.float32(0.0))

    # --- self-attention (nhead=2, head_dim=1 -> scale == 1.0) --------------------
    # Projections are broadcast-FMAs; the B*NHEAD score blocks are stacked into
    # ONE lane-dense [B*NHEAD*L, L] tensor so the masked softmax and the p.v
    # reduction run once. The python loops below only emit static slices /
    # broadcasts; the heavy EUP/XLU work happens on the stacked tensor.
    saw = pk_ref[R_SAW:R_SAW + E, 0:3 * E]                    # [2, 6]
    qkv = (hb[:, 0:1] * saw[0:1, :] + hb[:, 1:2] * saw[1:2, :]
           + prow(R_SAB, 3 * E))                              # [N, 6]
    kv_t = qkv[:, E:3 * E].T                                  # [4, N] one 2-D transpose

    s_blocks, v_blocks = [], []
    for b in range(B):
        for hd in range(NHEAD):
            q_col = qkv[b * L:(b + 1) * L, hd:hd + 1]                       # [L, 1]
            k_row = kv_t[hd:hd + 1, b * L:(b + 1) * L]                      # [1, L]
            v_row = kv_t[NHEAD + hd:NHEAD + hd + 1, b * L:(b + 1) * L]      # [1, L]
            s_blocks.append(q_col * k_row + mask)                           # [L, L]
            v_blocks.append(jnp.broadcast_to(v_row, (L, L)))
    s = jnp.concatenate(s_blocks, axis=0)                     # [B*NHEAD*L, L]
    vv = jnp.concatenate(v_blocks, axis=0)                    # [B*NHEAD*L, L]
    s = s - jnp.max(s, axis=-1, keepdims=True)
    pr = jnp.exp(s)
    pr = pr / jnp.sum(pr, axis=-1, keepdims=True)             # exact divide (see header)
    ctx = jnp.sum(pr * vv, axis=-1, keepdims=True)            # [B*NHEAD*L, 1]

    saow = pk_ref[R_SAOW:R_SAOW + E, 0:E]                     # [2, 2]
    sa_blocks = []
    for b in range(B):
        c0 = ctx[(b * NHEAD + 0) * L:(b * NHEAD + 1) * L, :]                # [L, 1]
        c1 = ctx[(b * NHEAD + 1) * L:(b * NHEAD + 2) * L, :]                # [L, 1]
        sa_blocks.append(c0 * saow[0:1, :] + c1 * saow[1:2, :]
                         + prow(R_SAOB, E))                                 # [L, 2]
    sa = jnp.concatenate(sa_blocks, axis=0)                   # [N, 2]
    hb = _layernorm2(hb + sa, prow(R_LN1W, E), prow(R_LN1B, E))

    # --- cross-attention over the all-ones memory == constant (exact fold) -------
    hb = _layernorm2(hb + prow(R_CA, E), prow(R_LN2W, E), prow(R_LN2B, E))

    # --- feed-forward 2 -> 2048 -> 2 ----------------------------------------------
    ff = jnp.maximum(hb[:, 0:1] * ffp_ref[0:1, :] + hb[:, 1:2] * ffp_ref[1:2, :]
                     + ffp_ref[2:3, :], 0.0)                  # [N, 2048]
    # TODO(synk): if B*L ever grows to >=128 rows, run this projection on the MXU
    # (lax.dot_general contracting the 2048 axis, f2w stays lane-dense [2, 2048]).
    ffo = _reduce_linear(ff, ffp_ref[3:5, :], prow(R_F2B, E))               # [N, 2]
    hb = _layernorm2(hb + ffo, prow(R_LN3W, E), prow(R_LN3B, E))

    # --- prediction head (all VPU/XLU) ---------------------------------------------
    y = jnp.maximum(_fma_linear(hb, pk_ref[R_L1W:R_L1W + E, 0:H],
                                prow(R_L1B, H)), 0.0)                       # [N, 8]
    # one_hot(t) @ l2w[8:] was gathered host-side into t_emb
    z = jnp.maximum(_fma_linear(y, pk_ref[R_L2W:R_L2W + H, 0:H],
                                prow(R_L2B, H)) + t_emb, 0.0)               # [N, 8]
    out_ref[...] = _reduce_linear(z, pk_ref[R_L3W:R_L3W + E, 0:H],
                                  prow(R_L3B, E))                           # [N, 2]


# ---- host-side parameter packing -------------------------------------------------
def _pack_params(p):
    """Pack the ~20 tiny tensors into one [32, 32] buffer and the three 2048-wide
    FFN tensors into one [5, 2048] buffer (2 DMAs total for all parameters)."""
    E = EMBED_DIM
    # Exact fold of the cross-attention over the all-ones memory: every key/value
    # row is identical, the softmax is uniform, context == out_proj(v_proj(ones)).
    ca_v = p["caw"][0, 2 * E:] + p["caw"][1, 2 * E:] + p["cab"][0, 2 * E:]
    ca_const = (ca_v @ p["caow"] + p["caob"][0])[None, :]                   # [1, 2]

    groups = [
        (R_L2W, p["l2w"][:LAYER_SIZE]),
        (R_CW, p["cw"]),
        (R_L1W, p["l1w"]),
        (R_L3W, p["l3w"]),
        (R_SAW, p["saw"]),
        (R_SAOW, p["saow"]),
        (R_SAB, p["sab"]),
        (R_SAOB, p["saob"]),
        (R_CA, ca_const),
        (R_LN1W, p["ln1w"]), (R_LN1B, p["ln1b"]),
        (R_LN2W, p["ln2w"]), (R_LN2B, p["ln2b"]),
        (R_LN3W, p["ln3w"]), (R_LN3B, p["ln3b"]),
        (R_F2B, p["f2b"]),
        (R_L1B, p["l1b"]),
        (R_L2B, p["l2b"]),
        (R_L3B, p["l3b"]),
    ]
    pk = jnp.zeros((PK_ROWS, PK_W), jnp.float32)
    for row, a in groups:
        a = jnp.asarray(a, jnp.float32)
        pk = pk.at[row:row + a.shape[0], 0:a.shape[1]].set(a)
    ffp = jnp.concatenate([p["f1w"], p["f1b"], p["f2w"]], axis=0).astype(jnp.float32)
    return pk, ffp                                                           # [32,32], [5,2048]


def weather_predictor_forward(x, t_idx, params):
    """x: [B, S, 3] f32, t_idx: [B, L, 1] i32  ->  [B, L, 2] f32 (L = S - 7)."""
    B, S, _ = x.shape
    L = S - KERNEL_SIZE + 1
    N = B * L
    p = params

    # Host/XLA-side prep (pure layout / gathers; folds into the input DMA):
    #  - valid-conv im2col                               -> [N, 24]
    #  - one_hot(t) @ l2w[8:] == row gather of l2w by t  -> [N, 8]
    #  - positional encoding tiled over batch + conv bias-> [N, 2]
    xcol = jnp.concatenate([x[:, k:k + L, :] for k in range(KERNEL_SIZE)],
                           axis=-1).reshape(N, KC)
    t_emb = jnp.take(p["l2w"], LAYER_SIZE + t_idx.reshape(N).astype(jnp.int32), axis=0)
    pb = jnp.tile(p["pe"] + p["cb"], (B, 1))
    act = jnp.concatenate([xcol, t_emb, pb], axis=-1)          # [N, 34] one lane-dense DMA

    pk, ffp = _pack_params(p)

    # Single invocation, no grid: total footprint (params + the [N, 2048] FFN
    # activation) is << VMEM on v5e/v6e/v7x; per-grid-step overhead would only
    # add cost at this size, so no dimension_semantics / cross-core split.
    out = pl.pallas_call(
        functools.partial(weather_kernel, batch=B, length=L),
        out_shape=jax.ShapeDtypeStruct((N, EMBED_DIM), jnp.float32),
        in_specs=[pl.BlockSpec(memory_space=pltpu.MemorySpace.VMEM)] * 3,
        out_specs=pl.BlockSpec(memory_space=pltpu.MemorySpace.VMEM),
    )(act, ffp, pk)
    return out.reshape(B, L, EMBED_DIM)


# ---- pure-JAX reference (independent math: MXU dots, full cross-attention) -------
def _layernorm_ref(h, w, b):
    mu = jnp.mean(h, axis=-1, keepdims=True)
    d = h - mu
    var = jnp.mean(d * d, axis=-1, keepdims=True)
    return d * jax.lax.rsqrt(var + LN_EPS) * w + b


def _linear(a, w, b=None):
    y = jax.lax.dot_general(a, w, (((1,), (0,)), ((), ())),
                            preferred_element_type=jnp.float32)
    if b is not None:
        y = y + b
    return y


def _linear_t(a, w_t, b=None):
    y = jax.lax.dot_general(a, w_t, (((1,), (1,)), ((), ())),
                            preferred_element_type=jnp.float32)
    if b is not None:
        y = y + b
    return y


def _mha(q_in, kv_in, w_qkv, b_qkv, w_o, b_o, mask):
    """nn.MultiheadAttention semantics (weights pre-transposed to [in, out])."""
    E = EMBED_DIM
    q = _linear(q_in, w_qkv[:, 0:E], b_qkv[:, 0:E])
    k = _linear(kv_in, w_qkv[:, E:2 * E], b_qkv[:, E:2 * E])
    v = _linear(kv_in, w_qkv[:, 2 * E:3 * E], b_qkv[:, 2 * E:3 * E])
    scale = 1.0 / math.sqrt(HEAD_DIM)
    outs = []
    for h in range(NHEAD):
        sl = slice(h * HEAD_DIM, (h + 1) * HEAD_DIM)
        qh = q[:, sl] * scale
        kh = k[:, sl]
        vh = v[:, sl]
        s = jax.lax.dot_general(qh, kh, (((1,), (1,)), ((), ())),
                                preferred_element_type=jnp.float32)
        if mask is not None:
            s = s + mask
        s = s - jnp.max(s, axis=-1, keepdims=True)
        p = jnp.exp(s)
        p = p / jnp.sum(p, axis=-1, keepdims=True)
        outs.append(jax.lax.dot_general(p, vh, (((1,), (0,)), ((), ())),
                                        preferred_element_type=jnp.float32))
    ctx = jnp.concatenate(outs, axis=-1)
    return _linear(ctx, w_o, b_o)


def _forward_one_batch(xb, tb, p):
    """xb: [S, 3] f32, tb: [L, 1] i32 -> [L, 2] f32."""
    S = xb.shape[0]
    L = S - KERNEL_SIZE + 1
    E = EMBED_DIM

    cw = jnp.transpose(p["cw"].reshape(E, KERNEL_SIZE, CIN), (1, 2, 0))  # [K, CIN, E]
    hb = jnp.zeros((L, E), jnp.float32)
    for kk in range(KERNEL_SIZE):
        hb = hb + _linear(xb[kk:kk + L, :], cw[kk])
    hb = hb + p["cb"] + p["pe"]

    rows = jax.lax.broadcasted_iota(jnp.int32, (L, L), 0)
    cols = jax.lax.broadcasted_iota(jnp.int32, (L, L), 1)
    mask = jnp.where(cols > rows, jnp.float32(NEG_INF), jnp.float32(0.0))

    sa = _mha(hb, hb, p["saw"], p["sab"], p["saow"], p["saob"], mask)
    hb = _layernorm_ref(hb + sa, p["ln1w"], p["ln1b"])

    mem = jnp.ones((L, E), jnp.float32)
    ca = _mha(hb, mem, p["caw"], p["cab"], p["caow"], p["caob"], None)
    hb = _layernorm_ref(hb + ca, p["ln2w"], p["ln2b"])

    ff = jnp.maximum(_linear(hb, p["f1w"], p["f1b"]), 0.0)
    ff = _linear_t(ff, p["f2w"], p["f2b"])
    hb = _layernorm_ref(hb + ff, p["ln3w"], p["ln3b"])

    y = jnp.maximum(_linear(hb, p["l1w"], p["l1b"]), 0.0)
    cls = jax.lax.broadcasted_iota(jnp.int32, (L, NUM_CLASSES), 1)
    oh = (cls == tb).astype(jnp.float32)
    cat = jnp.concatenate([y, oh], axis=-1)
    z = jnp.maximum(_linear(cat, p["l2w"], p["l2b"]), 0.0)
    return _linear_t(z, p["l3w"], p["l3b"])


def forward_ref(x, t_idx, params):
    outs = [_forward_one_batch(x[b], t_idx[b], params) for b in range(x.shape[0])]
    return jnp.stack(outs, axis=0)


# ---- deterministic parameter construction -----------------------------------------
def make_pe(seq_len, d_model):
    position = np.arange(seq_len)[:, None].astype(np.float32)
    div_term = np.exp(np.arange(0, d_model, 2).astype(np.float32)
                      * (-math.log(10000.0) / d_model))
    pe = np.zeros((seq_len, d_model), np.float32)
    pe[:, 0::2] = np.sin(position * div_term)
    pe[:, 1::2] = np.cos(position * div_term)
    return jnp.asarray(pe)


def init_params(out_seq_len, key):
    keys = jax.random.split(key, 20)
    it = iter(range(20))

    def w(shape, scale=0.1):
        return (scale * jax.random.normal(keys[next(it)], shape)).astype(jnp.float32)

    E, F, H, K, C = EMBED_DIM, DIM_FF, LAYER_SIZE, KERNEL_SIZE, CIN
    return dict(
        pe=make_pe(out_seq_len, E),
        # Conv1d weight stored lane-dense as [out_ch, K*CIN]; element [e, k*CIN+c]
        cw=w((E, K * C)), cb=w((1, E), 0.01),
        # self-attention (in_proj / out_proj, pre-transposed to [in, out])
        saw=w((E, 3 * E)), sab=w((1, 3 * E), 0.01),
        saow=w((E, E)), saob=w((1, E), 0.01),
        # cross-attention (folded to a constant for the kernel, kept for the ref)
        caw=w((E, 3 * E)), cab=w((1, 3 * E), 0.01),
        caow=w((E, E)), caob=w((1, E), 0.01),
        # layer norms
        ln1w=jnp.ones((1, E), jnp.float32), ln1b=jnp.zeros((1, E), jnp.float32),
        ln2w=jnp.ones((1, E), jnp.float32), ln2b=jnp.zeros((1, E), jnp.float32),
        ln3w=jnp.ones((1, E), jnp.float32), ln3b=jnp.zeros((1, E), jnp.float32),
        # decoder feed-forward; f2w stored PRE-TRANSPOSED, lane-dense: [2, 2048]
        f1w=w((E, F), 0.05), f1b=w((1, F), 0.01),
        f2w=w((E, F), 0.05), f2b=w((1, E), 0.01),
        # head linears; l3w stored PRE-TRANSPOSED, lane-dense: [2, 8]
        l1w=w((E, H)), l1b=w((1, H), 0.01),
        l2w=w((H + NUM_CLASSES, H)), l2b=w((1, H), 0.01),
        l3w=w((E, H)), l3b=w((1, E), 0.01),
    )


if __name__ == "__main__":
    B, S = 2, 16                     # x: [batch, seq, 3 weather features]
    L = S - KERNEL_SIZE + 1          # conv 'valid' output length = 9

    key = jax.random.PRNGKey(0)
    kx, kt, kp = jax.random.split(key, 3)

    x = jax.random.normal(kx, (B, S, CIN), dtype=jnp.float32)
    # t mirrors the PyTorch `t` input: integer "month" labels in [0, 13) at channel 0
    t_full = jax.random.randint(kt, (B, S, 1), 0, NUM_CLASSES)

    params = init_params(L, kp)

    # glue (plain JAX): t[:, -L:, 0] -> int32 class indices, kept batch-first
    t_idx = t_full[:, -L:, 0:1].astype(jnp.int32)           # [B, L, 1]

    fwd = jax.jit(weather_predictor_forward)
    out = jax.block_until_ready(fwd(x, t_idx, params))

    ref = forward_ref(x, t_idx, params)
    np.testing.assert_allclose(np.asarray(out), np.asarray(ref), rtol=2e-3, atol=2e-3)
    assert out.shape == (B, L, EMBED_DIM)

    print("KERNEL_OK")
</pallas_src>

<mosaic_0001>
module attributes {stable_mosaic.version = 11 : i64} {
  func.func @weather_kernel(%arg0: memref<18x34xf32, #tpu.memory_space<vmem>>, %arg1: memref<5x2048xf32, #tpu.memory_space<vmem>>, %arg2: memref<32x32xf32, #tpu.memory_space<vmem>>, %arg3: memref<18x2xf32, #tpu.memory_space<vmem>>) attributes {dimension_semantics = [], scalar_prefetch = 0 : i64, scratch_operands = 0 : i64, tpu.core_type = #tpu.core_type<tc>} {
    %c0 = arith.constant 0 : index
    %c0_0 = arith.constant 0 : index
    %0 = vector.load %arg0[%c0, %c0_0] : memref<18x34xf32, #tpu.memory_space<vmem>>, vector<18x24xf32>
    %c0_1 = arith.constant 0 : index
    %c24 = arith.constant 24 : index
    %1 = vector.load %arg0[%c0_1, %c24] : memref<18x34xf32, #tpu.memory_space<vmem>>, vector<18x8xf32>
    %c0_2 = arith.constant 0 : index
    %c32 = arith.constant 32 : index
    %2 = vector.load %arg0[%c0_2, %c32] : memref<18x34xf32, #tpu.memory_space<vmem>>, vector<18x2xf32>
    %c8 = arith.constant 8 : index
    %c0_3 = arith.constant 0 : index
    %3 = vector.load %arg2[%c8, %c0_3] : memref<32x32xf32, #tpu.memory_space<vmem>>, vector<2x24xf32>
    %4 = vector.extract_strided_slice %3 {offsets = [0, 0], sizes = [1, 24], strides = [1, 1]} : vector<2x24xf32> to vector<1x24xf32>
    %5 = vector.broadcast %4 : vector<1x24xf32> to vector<18x24xf32>
    %6 = arith.mulf %0, %5 : vector<18x24xf32>
    %cst = arith.constant dense<0.000000e+00> : vector<18xf32>
    %7 = vector.multi_reduction <add>, %6, %cst [1] : vector<18x24xf32> to vector<18xf32>
    %8 = vector.shape_cast %7 : vector<18xf32> to vector<18x1xf32>
    %9 = vector.extract_strided_slice %3 {offsets = [1, 0], sizes = [1, 24], strides = [1, 1]} : vector<2x24xf32> to vector<1x24xf32>
    %10 = vector.broadcast %9 : vector<1x24xf32> to vector<18x24xf32>
    %11 = arith.mulf %0, %10 : vector<18x24xf32>
    %cst_4 = arith.constant dense<0.000000e+00> : vector<18xf32>
    %12 = vector.multi_reduction <add>, %11, %cst_4 [1] : vector<18x24xf32> to vector<18xf32>
    %13 = vector.shape_cast %12 : vector<18xf32> to vector<18x1xf32>
    %14 = tpu.concatenate %8, %13 in 1 : vector<18x1xf32>, vector<18x1xf32> -> vector<18x2xf32>
    %15 = arith.addf %14, %2 : vector<18x2xf32>
    %16 = tpu.iota {dimensions = array<i32: 0>} : vector<9x9xi32>
    %17 = tpu.iota {dimensions = array<i32: 1>} : vector<9x9xi32>
    %18 = arith.cmpi sgt, %17, %16 : vector<9x9xi32>
    %cst_5 = arith.constant -1.000000e+30 : f32
    %cst_6 = arith.constant 0.000000e+00 : f32
    %19 = vector.broadcast %cst_5 : f32 to vector<9x9xf32>
    %20 = vector.broadcast %cst_6 : f32 to vector<9x9xf32>
    %21 = arith.select %18, %19, %20 : vector<9x9xi1>, vector<9x9xf32>
    %c14 = arith.constant 14 : index
    %c0_7 = arith.constant 0 : index
    %22 = vector.load %arg2[%c14, %c0_7] : memref<32x32xf32, #tpu.memory_space<vmem>>, vector<2x6xf32>
    %23 = vector.extract_strided_slice %15 {offsets = [0, 0], sizes = [18, 1], strides = [1, 1]} : vector<18x2xf32> to vector<18x1xf32>
    %24 = vector.extract_strided_slice %22 {offsets = [0, 0], sizes = [1, 6], strides = [1, 1]} : vector<2x6xf32> to vector<1x6xf32>
    %25 = vector.broadcast %23 : vector<18x1xf32> to vector<18x6xf32>
    %26 = vector.broadcast %24 : vector<1x6xf32> to vector<18x6xf32>
    %27 = arith.mulf %25, %26 : vector<18x6xf32>
    %28 = vector.extract_strided_slice %15 {offsets = [0, 1], sizes = [18, 1], strides = [1, 1]} : vector<18x2xf32> to vector<18x1xf32>
    %29 = vector.extract_strided_slice %22 {offsets = [1, 0], sizes = [1, 6], strides = [1, 1]} : vector<2x6xf32> to vector<1x6xf32>
    %30 = vector.broadcast %28 : vector<18x1xf32> to vector<18x6xf32>
    %31 = vector.broadcast %29 : vector<1x6xf32> to vector<18x6xf32>
    %32 = arith.mulf %30, %31 : vector<18x6xf32>
    %33 = arith.addf %27, %32 : vector<18x6xf32>
    %c18 = arith.constant 18 : index
    %c0_8 = arith.constant 0 : index
    %34 = vector.load %arg2[%c18, %c0_8] : memref<32x32xf32, #tpu.memory_space<vmem>>, vector<1x6xf32>
    %35 = vector.broadcast %34 : vector<1x6xf32> to vector<18x6xf32>
    %36 = arith.addf %33, %35 : vector<18x6xf32>
    %37 = vector.extract_strided_slice %36 {offsets = [0, 2], sizes = [18, 4], strides = [1, 1]} : vector<18x6xf32> to vector<18x4xf32>
    %38 = tpu.transpose %37, [1, 0] : vector<18x4xf32> -> vector<4x18xf32>
    %39 = vector.extract_strided_slice %36 {offsets = [0, 0], sizes = [9, 1], strides = [1, 1]} : vector<18x6xf32> to vector<9x1xf32>
    %40 = vector.extract_strided_slice %38 {offsets = [0, 0], sizes = [1, 9], strides = [1, 1]} : vector<4x18xf32> to vector<1x9xf32>
    %41 = vector.extract_strided_slice %38 {offsets = [2, 0], sizes = [1, 9], strides = [1, 1]} : vector<4x18xf32> to vector<1x9xf32>
    %42 = vector.broadcast %39 : vector<9x1xf32> to vector<9x9xf32>
    %43 = vector.broadcast %40 : vector<1x9xf32> to vector<9x9xf32>
    %44 = arith.mulf %42, %43 : vector<9x9xf32>
    %45 = arith.addf %44, %21 : vector<9x9xf32>
    %46 = vector.shape_cast %41 : vector<1x9xf32> to vector<1x9xf32>
    %47 = vector.broadcast %46 : vector<1x9xf32> to vector<9x9xf32>
    %48 = vector.extract_strided_slice %36 {offsets = [0, 1], sizes = [9, 1], strides = [1, 1]} : vector<18x6xf32> to vector<9x1xf32>
    %49 = vector.extract_strided_slice %38 {offsets = [1, 0], sizes = [1, 9], strides = [1, 1]} : vector<4x18xf32> to vector<1x9xf32>
    %50 = vector.extract_strided_slice %38 {offsets = [3, 0], sizes = [1, 9], strides = [1, 1]} : vector<4x18xf32> to vector<1x9xf32>
    %51 = vector.broadcast %48 : vector<9x1xf32> to vector<9x9xf32>
    %52 = vector.broadcast %49 : vector<1x9xf32> to vector<9x9xf32>
    %53 = arith.mulf %51, %52 : vector<9x9xf32>
    %54 = arith.addf %53, %21 : vector<9x9xf32>
    %55 = vector.shape_cast %50 : vector<1x9xf32> to vector<1x9xf32>
    %56 = vector.broadcast %55 : vector<1x9xf32> to vector<9x9xf32>
    %57 = vector.extract_strided_slice %36 {offsets = [9, 0], sizes = [9, 1], strides = [1, 1]} : vector<18x6xf32> to vector<9x1xf32>
    %58 = vector.extract_strided_slice %38 {offsets = [0, 9], sizes = [1, 9], strides = [1, 1]} : vector<4x18xf32> to vector<1x9xf32>
    %59 = vector.extract_strided_slice %38 {offsets = [2, 9], sizes = [1, 9], strides = [1, 1]} : vector<4x18xf32> to vector<1x9xf32>
    %60 = vector.broadcast %57 : vector<9x1xf32> to vector<9x9xf32>
    %61 = vector.broadcast %58 : vector<1x9xf32> to vector<9x9xf32>
    %62 = arith.mulf %60, %61 : vector<9x9xf32>
    %63 = arith.addf %62, %21 : vector<9x9xf32>
    %64 = vector.shape_cast %59 : vector<1x9xf32> to vector<1x9xf32>
    %65 = vector.broadcast %64 : vector<1x9xf32> to vector<9x9xf32>
    %66 = vector.extract_strided_slice %36 {offsets = [9, 1], sizes = [9, 1], strides = [1, 1]} : vector<18x6xf32> to vector<9x1xf32>
    %67 = vector.extract_strided_slice %38 {offsets = [1, 9], sizes = [1, 9], strides = [1, 1]} : vector<4x18xf32> to vector<1x9xf32>
    %68 = vector.extract_strided_slice %38 {offsets = [3, 9], sizes = [1, 9], strides = [1, 1]} : vector<4x18xf32> to vector<1x9xf32>
    %69 = vector.broadcast %66 : vector<9x1xf32> to vector<9x9xf32>
    %70 = vector.broadcast %67 : vector<1x9xf32> to vector<9x9xf32>
    %71 = arith.mulf %69, %70 : vector<9x9xf32>
    %72 = arith.addf %71, %21 : vector<9x9xf32>
    %73 = vector.shape_cast %68 : vector<1x9xf32> to vector<1x9xf32>
    %74 = vector.broadcast %73 : vector<1x9xf32> to vector<9x9xf32>
    %75 = tpu.concatenate %45, %54, %63, %72 in 0 : vector<9x9xf32>, vector<9x9xf32>, vector<9x9xf32>, vector<9x9xf32> -> vector<36x9xf32>
    %76 = tpu.concatenate %47, %56, %65, %74 in 0 : vector<9x9xf32>, vector<9x9xf32>, vector<9x9xf32>, vector<9x9xf32> -> vector<36x9xf32>
    %cst_9 = arith.constant dense<0xFF800000> : vector<36xf32>
    %77 = vector.multi_reduction <maximumf>, %75, %cst_9 [1] : vector<36x9xf32> to vector<36xf32>
    %78 = vector.shape_cast %77 : vector<36xf32> to vector<36x1xf32>
    %79 = vector.broadcast %78 : vector<36x1xf32> to vector<36x9xf32>
    %80 = arith.subf %75, %79 : vector<36x9xf32>
    %81 = math.exp %80 : vector<36x9xf32>
    %cst_10 = arith.constant dense<0.000000e+00> : vector<36xf32>
    %82 = vector.multi_reduction <add>, %81, %cst_10 [1] : vector<36x9xf32> to vector<36xf32>
    %83 = vector.shape_cast %82 : vector<36xf32> to vector<36x1xf32>
    %84 = vector.broadcast %83 : vector<36x1xf32> to vector<36x9xf32>
    %85 = arith.divf %81, %84 : vector<36x9xf32>
    %86 = arith.mulf %85, %76 : vector<36x9xf32>
    %cst_11 = arith.constant dense<0.000000e+00> : vector<36xf32>
    %87 = vector.multi_reduction <add>, %86, %cst_11 [1] : vector<36x9xf32> to vector<36xf32>
    %88 = vector.shape_cast %87 : vector<36xf32> to vector<36x1xf32>
    %c16 = arith.constant 16 : index
    %c0_12 = arith.constant 0 : index
    %89 = vector.load %arg2[%c16, %c0_12] : memref<32x32xf32, #tpu.memory_space<vmem>>, vector<2x2xf32>
    %90 = vector.extract_strided_slice %88 {offsets = [0, 0], sizes = [9, 1], strides = [1, 1]} : vector<36x1xf32> to vector<9x1xf32>
    %91 = vector.extract_strided_slice %88 {offsets = [9, 0], sizes = [9, 1], strides = [1, 1]} : vector<36x1xf32> to vector<9x1xf32>
    %92 = vector.extract_strided_slice %89 {offsets = [0, 0], sizes = [1, 2], strides = [1, 1]} : vector<2x2xf32> to vector<1x2xf32>
    %93 = vector.broadcast %90 : vector<9x1xf32> to vector<9x2xf32>
    %94 = vector.broadcast %92 : vector<1x2xf32> to vector<9x2xf32>
    %95 = arith.mulf %93, %94 : vector<9x2xf32>
    %96 = vector.extract_strided_slice %89 {offsets = [1, 0], sizes = [1, 2], strides = [1, 1]} : vector<2x2xf32> to vector<1x2xf32>
    %97 = vector.broadcast %91 : vector<9x1xf32> to vector<9x2xf32>
    %98 = vector.broadcast %96 : vector<1x2xf32> to vector<9x2xf32>
    %99 = arith.mulf %97, %98 : vector<9x2xf32>
    %100 = arith.addf %95, %99 : vector<9x2xf32>
    %c19 = arith.constant 19 : index
    %c0_13 = arith.constant 0 : index
    %101 = vector.load %arg2[%c19, %c0_13] : memref<32x32xf32, #tpu.memory_space<vmem>>, vector<1x2xf32>
    %102 = vector.broadcast %101 : vector<1x2xf32> to vector<9x2xf32>
    %103 = arith.addf %100, %102 : vector<9x2xf32>
    %104 = vector.extract_strided_slice %88 {offsets = [18, 0], sizes = [9, 1], strides = [1, 1]} : vector<36x1xf32> to vector<9x1xf32>
    %105 = vector.extract_strided_slice %88 {offsets = [27, 0], sizes = [9, 1], strides = [1, 1]} : vector<36x1xf32> to vector<9x1xf32>
    %106 = vector.extract_strided_slice %89 {offsets = [0, 0], sizes = [1, 2], strides = [1, 1]} : vector<2x2xf32> to vector<1x2xf32>
    %107 = vector.broadcast %104 : vector<9x1xf32> to vector<9x2xf32>
    %108 = vector.broadcast %106 : vector<1x2xf32> to vector<9x2xf32>
    %109 = arith.mulf %107, %108 : vector<9x2xf32>
    %110 = vector.extract_strided_slice %89 {offsets = [1, 0], sizes = [1, 2], strides = [1, 1]} : vector<2x2xf32> to vector<1x2xf32>
    %111 = vector.broadcast %105 : vector<9x1xf32> to vector<9x2xf32>
    %112 = vector.broadcast %110 : vector<1x2xf32> to vector<9x2xf32>
    %113 = arith.mulf %111, %112 : vector<9x2xf32>
    %114 = arith.addf %109, %113 : vector<9x2xf32>
    %c19_14 = arith.constant 19 : index
    %c0_15 = arith.constant 0 : index
    %115 = vector.load %arg2[%c19_14, %c0_15] : memref<32x32xf32, #tpu.memory_space<vmem>>, vector<1x2xf32>
    %116 = vector.broadcast %115 : vector<1x2xf32> to vector<9x2xf32>
    %117 = arith.addf %114, %116 : vector<9x2xf32>
    %118 = tpu.concatenate %103, %117 in 0 : vector<9x2xf32>, vector<9x2xf32> -> vector<18x2xf32>
    %119 = arith.addf %15, %118 : vector<18x2xf32>
    %c21 = arith.constant 21 : index
    %c0_16 = arith.constant 0 : index
    %120 = vector.load %arg2[%c21, %c0_16] : memref<32x32xf32, #tpu.memory_space<vmem>>, vector<1x2xf32>
    %c22 = arith.constant 22 : index
    %c0_17 = arith.constant 0 : index
    %121 = vector.load %arg2[%c22, %c0_17] : memref<32x32xf32, #tpu.memory_space<vmem>>, vector<1x2xf32>
    %122 = vector.extract_strided_slice %119 {offsets = [0, 0], sizes = [18, 1], strides = [1, 1]} : vector<18x2xf32> to vector<18x1xf32>
    %123 = vector.extract_strided_slice %119 {offsets = [0, 1], sizes = [18, 1], strides = [1, 1]} : vector<18x2xf32> to vector<18x1xf32>
    %124 = arith.subf %122, %123 : vector<18x1xf32>
    %cst_18 = arith.constant 5.000000e-01 : f32
    %125 = vector.broadcast %cst_18 : f32 to vector<18x1xf32>
    %126 = arith.mulf %124, %125 : vector<18x1xf32>
    %127 = arith.mulf %126, %126 : vector<18x1xf32>
    %cst_19 = arith.constant 9.99999974E-6 : f32
    %128 = vector.broadcast %cst_19 : f32 to vector<18x1xf32>
    %129 = arith.addf %127, %128 : vector<18x1xf32>
    %130 = math.rsqrt %129 : vector<18x1xf32>
    %131 = arith.mulf %126, %130 : vector<18x1xf32>
    %cst_20 = arith.constant 0.000000e+00 : f32
    %132 = vector.broadcast %cst_20 : f32 to vector<18x1xf32>
    %133 = arith.subf %132, %131 : vector<18x1xf32>
    %134 = tpu.concatenate %131, %133 in 1 : vector<18x1xf32>, vector<18x1xf32> -> vector<18x2xf32>
    %135 = vector.broadcast %120 : vector<1x2xf32> to vector<18x2xf32>
    %136 = arith.mulf %134, %135 : vector<18x2xf32>
    %137 = vector.broadcast %121 : vector<1x2xf32> to vector<18x2xf32>
    %138 = arith.addf %136, %137 : vector<18x2xf32>
    %c20 = arith.constant 20 : index
    %c0_21 = arith.constant 0 : index
    %139 = vector.load %arg2[%c20, %c0_21] : memref<32x32xf32, #tpu.memory_space<vmem>>, vector<1x2xf32>
    %140 = vector.broadcast %139 : vector<1x2xf32> to vector<18x2xf32>
    %141 = arith.addf %138, %140 : vector<18x2xf32>
    %c23 = arith.constant 23 : index
    %c0_22 = arith.constant 0 : index
    %142 = vector.load %arg2[%c23, %c0_22] : memref<32x32xf32, #tpu.memory_space<vmem>>, vector<1x2xf32>
    %c24_23 = arith.constant 24 : index
    %c0_24 = arith.constant 0 : index
    %143 = vector.load %arg2[%c24_23, %c0_24] : memref<32x32xf32, #tpu.memory_space<vmem>>, vector<1x2xf32>
    %144 = vector.extract_strided_slice %141 {offsets = [0, 0], sizes = [18, 1], strides = [1, 1]} : vector<18x2xf32> to vector<18x1xf32>
    %145 = vector.extract_strided_slice %141 {offsets = [0, 1], sizes = [18, 1], strides = [1, 1]} : vector<18x2xf32> to vector<18x1xf32>
    %146 = arith.subf %144, %145 : vector<18x1xf32>
    %cst_25 = arith.constant 5.000000e-01 : f32
    %147 = vector.broadcast %cst_25 : f32 to vector<18x1xf32>
    %148 = arith.mulf %146, %147 : vector<18x1xf32>
    %149 = arith.mulf %148, %148 : vector<18x1xf32>
    %cst_26 = arith.constant 9.99999974E-6 : f32
    %150 = vector.broadcast %cst_26 : f32 to vector<18x1xf32>
    %151 = arith.addf %149, %150 : vector<18x1xf32>
    %152 = math.rsqrt %151 : vector<18x1xf32>
    %153 = arith.mulf %148, %152 : vector<18x1xf32>
    %cst_27 = arith.constant 0.000000e+00 : f32
    %154 = vector.broadcast %cst_27 : f32 to vector<18x1xf32>
    %155 = arith.subf %154, %153 : vector<18x1xf32>
    %156 = tpu.concatenate %153, %155 in 1 : vector<18x1xf32>, vector<18x1xf32> -> vector<18x2xf32>
    %157 = vector.broadcast %142 : vector<1x2xf32> to vector<18x2xf32>
    %158 = arith.mulf %156, %157 : vector<18x2xf32>
    %159 = vector.broadcast %143 : vector<1x2xf32> to vector<18x2xf32>
    %160 = arith.addf %158, %159 : vector<18x2xf32>
    %161 = vector.extract_strided_slice %160 {offsets = [0, 0], sizes = [18, 1], strides = [1, 1]} : vector<18x2xf32> to vector<18x1xf32>
    %c0_28 = arith.constant 0 : index
    %c0_29 = arith.constant 0 : index
    %162 = vector.load %arg1[%c0_28, %c0_29] : memref<5x2048xf32, #tpu.memory_space<vmem>>, vector<1x2048xf32>
    %163 = vector.broadcast %161 : vector<18x1xf32> to vector<18x2048xf32>
    %164 = vector.broadcast %162 : vector<1x2048xf32> to vector<18x2048xf32>
    %165 = arith.mulf %163, %164 : vector<18x2048xf32>
    %166 = vector.extract_strided_slice %160 {offsets = [0, 1], sizes = [18, 1], strides = [1, 1]} : vector<18x2xf32> to vector<18x1xf32>
    %c1 = arith.constant 1 : index
    %c0_30 = arith.constant 0 : index
    %167 = vector.load %arg1[%c1, %c0_30] : memref<5x2048xf32, #tpu.memory_space<vmem>>, vector<1x2048xf32>
    %168 = vector.broadcast %166 : vector<18x1xf32> to vector<18x2048xf32>
    %169 = vector.broadcast %167 : vector<1x2048xf32> to vector<18x2048xf32>
    %170 = arith.mulf %168, %169 : vector<18x2048xf32>
    %171 = arith.addf %165, %170 : vector<18x2048xf32>
    %c2 = arith.constant 2 : index
    %c0_31 = arith.constant 0 : index
    %172 = vector.load %arg1[%c2, %c0_31] : memref<5x2048xf32, #tpu.memory_space<vmem>>, vector<1x2048xf32>
    %173 = vector.broadcast %172 : vector<1x2048xf32> to vector<18x2048xf32>
    %174 = arith.addf %171, %173 : vector<18x2048xf32>
    %cst_32 = arith.constant 0.000000e+00 : f32
    %175 = vector.broadcast %cst_32 : f32 to vector<18x2048xf32>
    %176 = arith.maximumf %174, %175 : vector<18x2048xf32>
    %c3 = arith.constant 3 : index
    %c0_33 = arith.constant 0 : index
    %177 = vector.load %arg1[%c3, %c0_33] : memref<5x2048xf32, #tpu.memory_space<vmem>>, vector<2x2048xf32>
    %c27 = arith.constant 27 : index
    %c0_34 = arith.constant 0 : index
    %178 = vector.load %arg2[%c27, %c0_34] : memref<32x32xf32, #tpu.memory_space<vmem>>, vector<1x2xf32>
    %179 = vector.extract_strided_slice %177 {offsets = [0, 0], sizes = [1, 2048], strides = [1, 1]} : vector<2x2048xf32> to vector<1x2048xf32>
    %180 = vector.broadcast %179 : vector<1x2048xf32> to vector<18x2048xf32>
    %181 = arith.mulf %176, %180 : vector<18x2048xf32>
    %cst_35 = arith.constant dense<0.000000e+00> : vector<18xf32>
    %182 = vector.multi_reduction <add>, %181, %cst_35 [1] : vector<18x2048xf32> to vector<18xf32>
    %183 = vector.shape_cast %182 : vector<18xf32> to vector<18x1xf32>
    %184 = vector.extract_strided_slice %177 {offsets = [1, 0], sizes = [1, 2048], strides = [1, 1]} : vector<2x2048xf32> to vector<1x2048xf32>
    %185 = vector.broadcast %184 : vector<1x2048xf32> to vector<18x2048xf32>
    %186 = arith.mulf %176, %185 : vector<18x2048xf32>
    %cst_36 = arith.constant dense<0.000000e+00> : vector<18xf32>
    %187 = vector.multi_reduction <add>, %186, %cst_36 [1] : vector<18x2048xf32> to vector<18xf32>
    %188 = vector.shape_cast %187 : vector<18xf32> to vector<18x1xf32>
    %189 = tpu.concatenate %183, %188 in 1 : vector<18x1xf32>, vector<18x1xf32> -> vector<18x2xf32>
    %190 = vector.broadcast %178 : vector<1x2xf32> to vector<18x2xf32>
    %191 = arith.addf %189, %190 : vector<18x2xf32>
    %192 = arith.addf %160, %191 : vector<18x2xf32>
    %c25 = arith.constant 25 : index
    %c0_37 = arith.constant 0 : index
    %193 = vector.load %arg2[%c25, %c0_37] : memref<32x32xf32, #tpu.memory_space<vmem>>, vector<1x2xf32>
    %c26 = arith.constant 26 : index
    %c0_38 = arith.constant 0 : index
    %194 = vector.load %arg2[%c26, %c0_38] : memref<32x32xf32, #tpu.memory_space<vmem>>, vector<1x2xf32>
    %195 = vector.extract_strided_slice %192 {offsets = [0, 0], sizes = [18, 1], strides = [1, 1]} : vector<18x2xf32> to vector<18x1xf32>
    %196 = vector.extract_strided_slice %192 {offsets = [0, 1], sizes = [18, 1], strides = [1, 1]} : vector<18x2xf32> to vector<18x1xf32>
    %197 = arith.subf %195, %196 : vector<18x1xf32>
    %cst_39 = arith.constant 5.000000e-01 : f32
    %198 = vector.broadcast %cst_39 : f32 to vector<18x1xf32>
    %199 = arith.mulf %197, %198 : vector<18x1xf32>
    %200 = arith.mulf %199, %199 : vector<18x1xf32>
    %cst_40 = arith.constant 9.99999974E-6 : f32
    %201 = vector.broadcast %cst_40 : f32 to vector<18x1xf32>
    %202 = arith.addf %200, %201 : vector<18x1xf32>
    %203 = math.rsqrt %202 : vector<18x1xf32>
    %204 = arith.mulf %199, %203 : vector<18x1xf32>
    %cst_41 = arith.constant 0.000000e+00 : f32
    %205 = vector.broadcast %cst_41 : f32 to vector<18x1xf32>
    %206 = arith.subf %205, %204 : vector<18x1xf32>
    %207 = tpu.concatenate %204, %206 in 1 : vector<18x1xf32>, vector<18x1xf32> -> vector<18x2xf32>
    %208 = vector.broadcast %193 : vector<1x2xf32> to vector<18x2xf32>
    %209 = arith.mulf %207, %208 : vector<18x2xf32>
    %210 = vector.broadcast %194 : vector<1x2xf32> to vector<18x2xf32>
    %211 = arith.addf %209, %210 : vector<18x2xf32>
    %c10 = arith.constant 10 : index
    %c0_42 = arith.constant 0 : index
    %212 = vector.load %arg2[%c10, %c0_42] : memref<32x32xf32, #tpu.memory_space<vmem>>, vector<2x8xf32>
    %c28 = arith.constant 28 : index
    %c0_43 = arith.constant 0 : index
    %213 = vector.load %arg2[%c28, %c0_43] : memref<32x32xf32, #tpu.memory_space<vmem>>, vector<1x8xf32>
    %214 = vector.extract_strided_slice %211 {offsets = [0, 0], sizes = [18, 1], strides = [1, 1]} : vector<18x2xf32> to vector<18x1xf32>
    %215 = vector.extract_strided_slice %212 {offsets = [0, 0], sizes = [1, 8], strides = [1, 1]} : vector<2x8xf32> to vector<1x8xf32>
    %216 = vector.broadcast %214 : vector<18x1xf32> to vector<18x8xf32>
    %217 = vector.broadcast %215 : vector<1x8xf32> to vector<18x8xf32>
    %218 = arith.mulf %216, %217 : vector<18x8xf32>
    %219 = vector.broadcast %213 : vector<1x8xf32> to vector<18x8xf32>
    %220 = arith.addf %219, %218 : vector<18x8xf32>
    %221 = vector.extract_strided_slice %211 {offsets = [0, 1], sizes = [18, 1], strides = [1, 1]} : vector<18x2xf32> to vector<18x1xf32>
    %222 = vector.extract_strided_slice %212 {offsets = [1, 0], sizes = [1, 8], strides = [1, 1]} : vector<2x8xf32> to vector<1x8xf32>
    %223 = vector.broadcast %221 : vector<18x1xf32> to vector<18x8xf32>
    %224 = vector.broadcast %222 : vector<1x8xf32> to vector<18x8xf32>
    %225 = arith.mulf %223, %224 : vector<18x8xf32>
    %226 = arith.addf %220, %225 : vector<18x8xf32>
    %cst_44 = arith.constant 0.000000e+00 : f32
    %227 = vector.broadcast %cst_44 : f32 to vector<18x8xf32>
    %228 = arith.maximumf %226, %227 : vector<18x8xf32>
    %c0_45 = arith.constant 0 : index
    %c0_46 = arith.constant 0 : index
    %229 = vector.load %arg2[%c0_45, %c0_46] : memref<32x32xf32, #tpu.memory_space<vmem>>, vector<8x8xf32>
    %c29 = arith.constant 29 : index
    %c0_47 = arith.constant 0 : index
    %230 = vector.load %arg2[%c29, %c0_47] : memref<32x32xf32, #tpu.memory_space<vmem>>, vector<1x8xf32>
    %231 = vector.extract_strided_slice %228 {offsets = [0, 0], sizes = [18, 1], strides = [1, 1]} : vector<18x8xf32> to vector<18x1xf32>
    %232 = vector.extract_strided_slice %229 {offsets = [0, 0], sizes = [1, 8], strides = [1, 1]} : vector<8x8xf32> to vector<1x8xf32>
    %233 = vector.broadcast %231 : vector<18x1xf32> to vector<18x8xf32>
    %234 = vector.broadcast %232 : vector<1x8xf32> to vector<18x8xf32>
    %235 = arith.mulf %233, %234 : vector<18x8xf32>
    %236 = vector.broadcast %230 : vector<1x8xf32> to vector<18x8xf32>
    %237 = arith.addf %236, %235 : vector<18x8xf32>
    %238 = vector.extract_strided_slice %228 {offsets = [0, 1], sizes = [18, 1], strides = [1, 1]} : vector<18x8xf32> to vector<18x1xf32>
    %239 = vector.extract_strided_slice %229 {offsets = [1, 0], sizes = [1, 8], strides = [1, 1]} : vector<8x8xf32> to vector<1x8xf32>
    %240 = vector.broadcast %238 : vector<18x1xf32> to vector<18x8xf32>
    %241 = vector.broadcast %239 : vector<1x8xf32> to vector<18x8xf32>
    %242 = arith.mulf %240, %241 : vector<18x8xf32>
    %243 = arith.addf %237, %242 : vector<18x8xf32>
    %244 = vector.extract_strided_slice %228 {offsets = [0, 2], sizes = [18, 1], strides = [1, 1]} : vector<18x8xf32> to vector<18x1xf32>
    %245 = vector.extract_strided_slice %229 {offsets = [2, 0], sizes = [1, 8], strides = [1, 1]} : vector<8x8xf32> to vector<1x8xf32>
    %246 = vector.broadcast %244 : vector<18x1xf32> to vector<18x8xf32>
    %247 = vector.broadcast %245 : vector<1x8xf32> to vector<18x8xf32>
    %248 = arith.mulf %246, %247 : vector<18x8xf32>
    %249 = arith.addf %243, %248 : vector<18x8xf32>
    %250 = vector.extract_strided_slice %228 {offsets = [0, 3], sizes = [18, 1], strides = [1, 1]} : vector<18x8xf32> to vector<18x1xf32>
    %251 = vector.extract_strided_slice %229 {offsets = [3, 0], sizes = [1, 8], strides = [1, 1]} : vector<8x8xf32> to vector<1x8xf32>
    %252 = vector.broadcast %250 : vector<18x1xf32> to vector<18x8xf32>
    %253 = vector.broadcast %251 : vector<1x8xf32> to vector<18x8xf32>
    %254 = arith.mulf %252, %253 : vector<18x8xf32>
    %255 = arith.addf %249, %254 : vector<18x8xf32>
    %256 = vector.extract_strided_slice %228 {offsets = [0, 4], sizes = [18, 1], strides = [1, 1]} : vector<18x8xf32> to vector<18x1xf32>
    %257 = vector.extract_strided_slice %229 {offsets = [4, 0], sizes = [1, 8], strides = [1, 1]} : vector<8x8xf32> to vector<1x8xf32>
    %258 = vector.broadcast %256 : vector<18x1xf32> to vector<18x8xf32>
    %259 = vector.broadcast %257 : vector<1x8xf32> to vector<18x8xf32>
    %260 = arith.mulf %258, %259 : vector<18x8xf32>
    %261 = arith.addf %255, %260 : vector<18x8xf32>
    %262 = vector.extract_strided_slice %228 {offsets = [0, 5], sizes = [18, 1], strides = [1, 1]} : vector<18x8xf32> to vector<18x1xf32>
    %263 = vector.extract_strided_slice %229 {offsets = [5, 0], sizes = [1, 8], strides = [1, 1]} : vector<8x8xf32> to vector<1x8xf32>
    %264 = vector.broadcast %262 : vector<18x1xf32> to vector<18x8xf32>
    %265 = vector.broadcast %263 : vector<1x8xf32> to vector<18x8xf32>
    %266 = arith.mulf %264, %265 : vector<18x8xf32>
    %267 = arith.addf %261, %266 : vector<18x8xf32>
    %268 = vector.extract_strided_slice %228 {offsets = [0, 6], sizes = [18, 1], strides = [1, 1]} : vector<18x8xf32> to vector<18x1xf32>
    %269 = vector.extract_strided_slice %229 {offsets = [6, 0], sizes = [1, 8], strides = [1, 1]} : vector<8x8xf32> to vector<1x8xf32>
    %270 = vector.broadcast %268 : vector<18x1xf32> to vector<18x8xf32>
    %271 = vector.broadcast %269 : vector<1x8xf32> to vector<18x8xf32>
    %272 = arith.mulf %270, %271 : vector<18x8xf32>
    %273 = arith.addf %267, %272 : vector<18x8xf32>
    %274 = vector.extract_strided_slice %228 {offsets = [0, 7], sizes = [18, 1], strides = [1, 1]} : vector<18x8xf32> to vector<18x1xf32>
    %275 = vector.extract_strided_slice %229 {offsets = [7, 0], sizes = [1, 8], strides = [1, 1]} : vector<8x8xf32> to vector<1x8xf32>
    %276 = vector.broadcast %274 : vector<18x1xf32> to vector<18x8xf32>
    %277 = vector.broadcast %275 : vector<1x8xf32> to vector<18x8xf32>
    %278 = arith.mulf %276, %277 : vector<18x8xf32>
    %279 = arith.addf %273, %278 : vector<18x8xf32>
    %280 = arith.addf %279, %1 : vector<18x8xf32>
    %cst_48 = arith.constant 0.000000e+00 : f32
    %281 = vector.broadcast %cst_48 : f32 to vector<18x8xf32>
    %282 = arith.maximumf %280, %281 : vector<18x8xf32>
    %c12 = arith.constant 12 : index
    %c0_49 = arith.constant 0 : index
    %283 = vector.load %arg2[%c12, %c0_49] : memref<32x32xf32, #tpu.memory_space<vmem>>, vector<2x8xf32>
    %c30 = arith.constant 30 : index
    %c0_50 = arith.constant 0 : index
    %284 = vector.load %arg2[%c30, %c0_50] : memref<32x32xf32, #tpu.memory_space<vmem>>, vector<1x2xf32>
    %285 = vector.extract_strided_slice %283 {offsets = [0, 0], sizes = [1, 8], strides = [1, 1]} : vector<2x8xf32> to vector<1x8xf32>
    %286 = vector.broadcast %285 : vector<1x8xf32> to vector<18x8xf32>
    %287 = arith.mulf %282, %286 : vector<18x8xf32>
    %cst_51 = arith.constant dense<0.000000e+00> : vector<18xf32>
    %288 = vector.multi_reduction <add>, %287, %cst_51 [1] : vector<18x8xf32> to vector<18xf32>
    %289 = vector.shape_cast %288 : vector<18xf32> to vector<18x1xf32>
    %290 = vector.extract_strided_slice %283 {offsets = [1, 0], sizes = [1, 8], strides = [1, 1]} : vector<2x8xf32> to vector<1x8xf32>
    %291 = vector.broadcast %290 : vector<1x8xf32> to vector<18x8xf32>
    %292 = arith.mulf %282, %291 : vector<18x8xf32>
    %cst_52 = arith.constant dense<0.000000e+00> : vector<18xf32>
    %293 = vector.multi_reduction <add>, %292, %cst_52 [1] : vector<18x8xf32> to vector<18xf32>
    %294 = vector.shape_cast %293 : vector<18xf32> to vector<18x1xf32>
    %295 = tpu.concatenate %289, %294 in 1 : vector<18x1xf32>, vector<18x1xf32> -> vector<18x2xf32>
    %296 = vector.broadcast %284 : vector<1x2xf32> to vector<18x2xf32>
    %297 = arith.addf %295, %296 : vector<18x2xf32>
    %c0_53 = arith.constant 0 : index
    %c0_54 = arith.constant 0 : index
    %298 = vector.load %arg3[%c0_53, %c0_54] : memref<18x2xf32, #tpu.memory_space<vmem>>, vector<18x2xf32>
    tpu.vector_store %arg3[%c0_53, %c0_54], %297 {strides = array<i32>} : memref<18x2xf32, #tpu.memory_space<vmem>>, vector<18x2xf32>,
    return
  }
}

</mosaic_0001>

<llo_original>
// kernel: tile.9
$region0: #{tile.9}
  %s0 = inlined_call_operand.vmem [shape: f32[2,9,2], index: 0, kind: input, shape index: {}]
  %s1 = inlined_call_operand.vmem [shape: f32[18,2], index: 1, kind: output, shape index: {}]
  $region1: #{tile.9} parent=0
    #allocation0 [shape = 'u8[4096]{0}', space=vmem, size = 0x1000, scoped, tag = 'scoped mem for output reshape']
    #allocation1 [shape = 'u8[8192]{0}', space=vmem, size = 0x2000, scoped, tag = 'scoped mem for input reshape']
    %s3 = ssub.s32 4, 1
    %s4 = scalar_lea.vmem %s0, 2
    %v5 = vld [vmem:[%s4] sm:%s3]
    %s6 = scalar_lea.vmem [#allocation1], 8
    %7 = vst [vmem:[%s6] sm:%s3] %v5
    %v8 = vld [vmem:[%s0] sm:%s3]
    %9 = vst [vmem:[#allocation1] sm:%s3] %v8
    %s10 = smov 3
    %v11 = vld [vmem:[#allocation1] ss:$8 sm:%s10]
    %vm12 = vcmask 72704
    %13 = vst.msk [vmem:[#allocation0] sm:$0x3] %vm12, %v11
    %s14 = scalar_lea.vmem [#allocation1], 1
    %s15 = smov 3
    %v16 = vld [vmem:[%s14] ss:$8 sm:%s15]
    %17 = vrot.lane.b32.xlu0 %v16, 9
    %v18 = vpop.permute.xlu0 %17
    %vm19 = vcmask 146504
    %20 = vst.msk [vmem:[#allocation0] sm:$0x3] %vm19, %v18
    %s22 = ssub.s32 4, 1
    %v23 = vld [vmem:[#allocation0] sm:%s22]
    %s25 = ssub.s32 4, 1
    %26 = vst [vmem:[%s1] sm:%s25] %v23

// kernel: weather_predictor_forward.1
$region0: #{weather_predictor_forward.1}
  #allocation0 [shape = 'u32[]', space=smem, size = 0x4, offset = 0x4, fixed_abs, tag = 'smem constant byte address 0x4 - core index']
  #allocation1 [shape = 'u32[72,128]{1,0:T(1,128)}', space=vmem, size = 0x9000, scoped, tag = 'internal scratch']
  %s0 = inlined_call_operand.vmem [shape: f32[18,34], index: 0, kind: input, shape index: {}]
  %s1 = inlined_call_operand.vmem [shape: f32[5,2048], index: 1, kind: input, shape index: {}]
  %s2 = inlined_call_operand.vmem [shape: f32[32,32], index: 2, kind: input, shape index: {}]
  %s3 = inlined_call_operand.vmem [shape: f32[18,2], index: 3, kind: output, shape index: {}]
  %s4 = sld [smem:[#allocation0]]
  $region22: #{weather_predictor_forward.1} parent=0
    _
  %s6 = ssub.s32 1, %s4
  %s7 = scalar_select 0, %s6, %s4
  // Predicated region
  $region2: #{weather_predictor_forward.1} parent=0 // pred_check
    _
  $region3: #{weather_predictor_forward.1} parent=0 // pred_check_branch
    %9 = sbr.rel (0) target = $region5
  $region4: #{weather_predictor_forward.1} parent=0 // pred_region
    _
  $region5: #{weather_predictor_forward.1} parent=0 // pred_fallthru
    _
  // Predicated region
  $region6: #{weather_predictor_forward.1} parent=0 // pred_check
    _
  $region7: #{weather_predictor_forward.1} parent=0 // pred_check_branch
    %11 = sbr.rel (0) target = $region9
  $region8: #{weather_predictor_forward.1} parent=0 // pred_region
    _
  $region9: #{weather_predictor_forward.1} parent=0 // pred_fallthru
    _
  // Predicated region
  $region10: #{weather_predictor_forward.1} parent=0 // pred_check
    _
  $region11: #{weather_predictor_forward.1} parent=0 // pred_check_branch
    %13 = sbr.rel (0) target = $region13
  $region12: #{weather_predictor_forward.1} parent=0 // pred_region
    _
  $region13: #{weather_predictor_forward.1} parent=0 // pred_fallthru
    _
  %v14 = vld [vmem:[%s0] sm:$0xff]
  %v15 = vld [vmem:[%s0 + $0x8] sm:$0xff]
  %v16 = vld [vmem:[%s0 + $0x10] sm:$0x3]
  %v17 = vld [vmem:[%s2 + $0x8] sm:$0x3]
  %v18 = vperm.slane %v17, 0
  %v19 = vmul.f32 %v14, %v18
  %v20 = vmul.f32 %v15, %v18
  %v21 = vmul.f32 %v16, %v18
  %vm22 = vcmask 195584
  %v23 = vsel %vm22, %v19, 0.0
  %24 = vadd.xlane.f32.xlu0 %v23
  %v25 = vpop.xlane.xlu0 %24
  %v26 = vsel %vm22, %v20, 0.0
  %27 = vadd.xlane.f32.xlu0 %v26
  %v28 = vpop.xlane.xlu0 %27
  %vm29 = vcmask 189440
  %v30 = vsel %vm29, %v21, 0.0
  %31 = vadd.xlane.f32.xlu0 %v30
  %v32 = vpop.xlane.xlu0 %31
  %v33 = vperm.slane %v17, 1
  %v34 = vmul.f32 %v14, %v33
  %v35 = vmul.f32 %v15, %v33
  %v36 = vmul.f32 %v16, %v33
  %v37 = vsel %vm22, %v34, 0.0
  %38 = vadd.xlane.f32.xlu0 %v37
  %v39 = vpop.xlane.xlu0 %38
  %v40 = vsel %vm22, %v35, 0.0
  %41 = vadd.xlane.f32.xlu0 %v40
  %v42 = vpop.xlane.xlu0 %41
  %v43 = vsel %vm29, %v36, 0.0
  %44 = vadd.xlane.f32.xlu0 %v43
  %v45 = vpop.xlane.xlu0 %44
  %vm46 = vcmask 7168
  %v47 = vsel %vm46, %v25, %v39
  %v48 = vsel %vm46, %v28, %v42
  %v49 = vsel %vm46, %v32, %v45
  %53 = vrot.lane.b32.xlu0 %v14, 96
  %v54 = vpop.permute.xlu0 %53
  %55 = vrot.lane.b32.xlu0 %v15, 96
  %v56 = vpop.permute.xlu0 %55
  %57 = vrot.lane.b32.xlu0 %v16, 96
  %v58 = vpop.permute.xlu0 %57
  %v62 = vadd.f32 %v47, %v54
  %v63 = vadd.f32 %v48, %v56
  %v64 = vadd.f32 %v49, %v58
  %v65 = vlaneseq
  %v66 = vshrl.u32 %v65, 7
  %v67 = vadd.s32 %v66, 8
  %v68 = vlaneseq
  %v69 = vand.u32 %v68, 127
  %vm70 = vcmp.gt.s32.totalorder %v69, %v66
  %vm71 = vcmp.gt.s32.totalorder %v69, %v67
  %v72 = vsel %vm70, -1e+30, 0.0
  %v73 = vsel %vm71, -1e+30, 0.0
  %v74 = vld [vmem:[%s2 + $0xe] sm:$0x3]
  %76 = vset.pattern.permute.xlu0 0
  %77 = vperm.xlu0 %76, %v62
  %v78 = vpop.permute.xlu0 %77
  %81 = vset.pattern.permute.xlu0 0
  %82 = vperm.xlu0 %81, %v63
  %v83 = vpop.permute.xlu0 %82
  %86 = vset.pattern.permute.xlu0 0
  %87 = vperm.xlu0 %86, %v64
  %v88 = vpop.permute.xlu0 %87
  %v90 = vperm.slane %v74, 0
  %v91 = vmul.f32 %v78, %v90
  %v92 = vmul.f32 %v83, %v90
  %v93 = vmul.f32 %v88, %v90
  %94 = vset.pattern.permute.xlu0 1
  %95 = vperm.xlu0 %94, %v62
  %v96 = vpop.permute.xlu0 %95
  %98 = vset.pattern.permute.xlu0 1
  %99 = vperm.xlu0 %98, %v63
  %v100 = vpop.permute.xlu0 %99
  %102 = vset.pattern.permute.xlu0 1
  %103 = vperm.xlu0 %102, %v64
  %v104 = vpop.permute.xlu0 %103
  %v106 = vperm.slane %v74, 1
  %v107 = vmul.f32 %v96, %v106
  %v108 = vmul.f32 %v100, %v106
  %v109 = vmul.f32 %v104, %v106
  %v110 = vadd.f32 %v91, %v107
  %v111 = vadd.f32 %v92, %v108
  %v112 = vadd.f32 %v93, %v109
  %v113 = vld [vmem:[%s2 + $0x12] sm:$0x1]
  %v114 = vperm.slane %v113, 0
  %v115 = vadd.f32 %v110, %v114
  %v116 = vadd.f32 %v111, %v114
  %v117 = vadd.f32 %v112, %v114
  %121 = vrot.lane.b32.xlu0 %v115, 126
  %v122 = vpop.permute.xlu0 %121
  %123 = vrot.lane.b32.xlu0 %v116, 126
  %v124 = vpop.permute.xlu0 %123
  %125 = vrot.lane.b32.xlu0 %v117, 126
  %v126 = vpop.permute.xlu0 %125
  %130 = vxpose.xlu0.b32.start [1/16] %v122, 128
  %131 = vxpose.xlu0.b32.cont [2/16] %v124, 128
  %132 = vxpose.xlu0.b32.cont [3/16] %v126, 128
  %133 = vxpose.xlu0.b32.cont [4/16] 0.0, 128
  %134 = vxpose.xlu0.b32.cont [5/16] 0.0, 128
  %135 = vxpose.xlu0.b32.cont [6/16] 0.0, 128
  %136 = vxpose.xlu0.b32.cont [7/16] 0.0, 128
  %137 = vxpose.xlu0.b32.cont [8/16] 0.0, 128
  %138 = vxpose.xlu0.b32.cont [9/16] 0.0, 128
  %139 = vxpose.xlu0.b32.cont [10/16] 0.0, 128
  %140 = vxpose.xlu0.b32.cont [11/16] 0.0, 128
  %141 = vxpose.xlu0.b32.cont [12/16] 0.0, 128
  %142 = vxpose.xlu0.b32.cont [13/16] 0.0, 128
  %143 = vxpose.xlu0.b32.cont [14/16] 0.0, 128
  %144 = vxpose.xlu0.b32.cont [15/16] 0.0, 128
  %145 = vxpose.xlu0.b32.end [16/16] 0.0, 128
  %v146 = vpop.trf.xlu0
  %v147 = vpop.trf.xlu0
  %v148 = vpop.trf.xlu0
  %v149 = vpop.trf.xlu0
  %v150 = vpop.trf.xlu0
  %v151 = vpop.trf.xlu0
  %v152 = vpop.trf.xlu0
  %v153 = vpop.trf.xlu0
  %v154 = vpop.trf.xlu0
  %v155 = vpop.trf.xlu0
  %v156 = vpop.trf.xlu0
  %v157 = vpop.trf.xlu0
  %v158 = vpop.trf.xlu0
  %v159 = vpop.trf.xlu0
  %v160 = vpop.trf.xlu0
  %v161 = vpop.trf.xlu0
  %162 = vset.pattern.permute.xlu0 0
  %163 = vperm.xlu0 %162, %v115
  %v164 = vpop.permute.xlu0 %163
  %166 = vset.pattern.permute.xlu0 0
  %167 = vperm.xlu0 %166, %v116
  %v168 = vpop.permute.xlu0 %167
  %v170 = vperm.slane %v146, 0
  %v171 = vmul.f32 %v164, %v170
  %v172 = vmul.f32 %v168, %v170
  %v173 = vadd.f32 %v171, %v72
  %v174 = vadd.f32 %v172, %v73
  %v175 = vperm.slane %v146, 2
  %176 = vset.pattern.permute.xlu0 1
  %177 = vperm.xlu0 %176, %v115
  %v178 = vpop.permute.xlu0 %177
  %180 = vset.pattern.permute.xlu0 1
  %181 = vperm.xlu0 %180, %v116
  %v182 = vpop.permute.xlu0 %181
  %v184 = vperm.slane %v146, 1
  %v185 = vmul.f32 %v178, %v184
  %v186 = vmul.f32 %v182, %v184
  %v187 = vadd.f32 %v185, %v72
  %v188 = vadd.f32 %v186, %v73
  %v189 = vperm.slane %v146, 3
  %190 = vset.pattern.permute.xlu0 0
  %191 = vperm.xlu0 %190, %v117
  %v192 = vpop.permute.xlu0 %191
  %v194 = vmul.f32 %v192, %v170
  %vm197 = vcmask 1040384
  %v198 = vrot.slane %v72, 7
  %v199 = vrot.slane %v73, 7
  %v200 = vsel %vm197, %v198, %v199
  %201 = vrot.lane.b32.xlu0 %v198, 9
  %v202 = vpop.permute.xlu0 %201
  %203 = vrot.lane.b32.xlu0 %v200, 9
  %v204 = vpop.permute.xlu0 %203
  %v207 = vadd.f32 %v172, %v202
  %v208 = vadd.f32 %v194, %v204
  %209 = vset.pattern.permute.xlu0 1
  %210 = vperm.xlu0 %209, %v117
  %v211 = vpop.permute.xlu0 %210
  %v213 = vmul.f32 %v211, %v184
  %v214 = vadd.f32 %v186, %v202
  %v215 = vadd.f32 %v213, %v204
  %v218 = vrot.slane %v187, 7
  %v219 = vrot.slane %v188, 7
  %v220 = vsel %vm197, %v218, %v219
  %v225 = vrot.slane %v207, 7
  %v226 = vrot.slane %v208, 7
  %v227 = vsel %vm197, %v225, %v226
  %228 = vrot.lane.b32.xlu0 %v225, 119
  %v229 = vpop.permute.xlu0 %228
  %230 = vrot.lane.b32.xlu0 %v227, 119
  %v231 = vpop.permute.xlu0 %230
  %vm236 = vcmask 1041408
  %v237 = vrot.slane %v214, 6
  %v238 = vrot.slane %v215, 6
  %v239 = vsel %vm236, %v237, %v238
  %240 = vrot.lane.b32.xlu0 %v237, 119
  %v241 = vpop.permute.xlu0 %240
  %242 = vrot.lane.b32.xlu0 %v239, 119
  %v243 = vpop.permute.xlu0 %242
  %v246 = vsel %vm197, %v174, %v218
  %v247 = vsel %vm236, %v220, %v229
  %vm248 = vcmask 1042432
  %v249 = vsel %vm248, %v231, %v241
  %251 = vrot.lane.b32.xlu0 %v175, 119
  %v252 = vpop.permute.xlu0 %251
  %255 = vrot.lane.b32.xlu0 %v189, 119
  %v256 = vpop.permute.xlu0 %255
  %v258 = vsel %vm197, %v175, %v189
  %v259 = vsel %vm236, %v189, %v252
  %v260 = vsel %vm248, %v252, %v256
  %vm261 = vcmask 72704
  %v262 = vsel %vm261, %v173, -inf
  %263 = vmax.xlane.f32.xlu0 %v262
  %v264 = vpop.xlane.xlu0 %263
  %v265 = vsel %vm261, %v246, -inf
  %266 = vmax.xlane.f32.xlu0 %v265
  %v267 = vpop.xlane.xlu0 %266
  %v268 = vsel %vm261, %v247, -inf
  %269 = vmax.xlane.f32.xlu0 %v268
  %v270 = vpop.xlane.xlu0 %269
  %v271 = vsel %vm261, %v249, -inf
  %272 = vmax.xlane.f32.xlu0 %v271
  %v273 = vpop.xlane.xlu0 %272
  %vm274 = vcmask 68608
  %v275 = vsel %vm274, %v243, -inf
  %276 = vmax.xlane.f32.xlu0 %v275
  %v277 = vpop.xlane.xlu0 %276
  %v278 = vsub.f32 %v173, %v264
  %v279 = vsub.f32 %v246, %v267
  %v280 = vsub.f32 %v247, %v270
  %v281 = vsub.f32 %v249, %v273
  %v282 = vsub.f32 %v243, %v277
  %v283 = vmul.f32 %v278, 1.442695
  %v284 = vpow.pop %v283
  %v285 = vmul.f32 %v279, 1.442695
  %v286 = vpow.pop %v285
  %v287 = vmul.f32 %v280, 1.442695
  %v288 = vpow.pop %v287
  %v289 = vmul.f32 %v281, 1.442695
  %v290 = vpow.pop %v289
  %v291 = vmul.f32 %v282, 1.442695
  %v292 = vpow.pop %v291
  %v293 = vsel %vm261, %v284, 0.0
  %294 = vadd.xlane.f32.xlu0 %v293
  %v295 = vpop.xlane.xlu0 %294
  %v296 = vsel %vm261, %v286, 0.0
  %297 = vadd.xlane.f32.xlu0 %v296
  %v298 = vpop.xlane.xlu0 %297
  %v299 = vsel %vm261, %v288, 0.0
  %300 = vadd.xlane.f32.xlu0 %v299
  %v301 = vpop.xlane.xlu0 %300
  %v302 = vsel %vm261, %v290, 0.0
  %303 = vadd.xlane.f32.xlu0 %v302
  %v304 = vpop.xlane.xlu0 %303
  %v305 = vsel %vm274, %v292, 0.0
  %306 = vadd.xlane.f32.xlu0 %v305
  %v307 = vpop.xlane.xlu0 %306
  %v308 = vrcp.pop %v295
  %v309 = vmul.f32 %v295, %v308
  %v310 = vsub.f32 1.0, %v309
  %v311 = vmul.f32 %v308, %v310
  %v312 = vadd.f32 %v308, %v311
  %vm313 = vweird.f32 %v295
  %vm314 = vweird.f32 %v308
  %vm315 = vmor %vm313, %vm314
  %v316 = vsel %vm315, %v308, %v312
  %v317 = vand.u32 2147483647, %v295
  %vm318 = vcmp.eq.f32.partialorder %v317, 8.507059e+37
  %v319 = vand.u32 %v295, 2147483648
  %v320 = vor.u32 1.1754944e-38, %v319
  %v321 = vsel %vm318, %v320, %v316
  %v322 = vmul.f32 %v284, %v321
  %v323 = vrcp.pop %v298
  %v324 = vmul.f32 %v298, %v323
  %v325 = vsub.f32 1.0, %v324
  %v326 = vmul.f32 %v323, %v325
  %v327 = vadd.f32 %v323, %v326
  %vm328 = vweird.f32 %v298
  %vm329 = vweird.f32 %v323
  %vm330 = vmor %vm328, %vm329
  %v331 = vsel %vm330, %v323, %v327
  %v332 = vand.u32 2147483647, %v298
  %vm333 = vcmp.eq.f32.partialorder %v332, 8.507059e+37
  %v334 = vand.u32 %v298, 2147483648
  %v335 = vor.u32 1.1754944e-38, %v334
  %v336 = vsel %vm333, %v335, %v331
  %v337 = vmul.f32 %v286, %v336
  %v338 = vrcp.pop %v301
  %v339 = vmul.f32 %v301, %v338
  %v340 = vsub.f32 1.0, %v339
  %v341 = vmul.f32 %v338, %v340
  %v342 = vadd.f32 %v338, %v341
  %vm343 = vweird.f32 %v301
  %vm344 = vweird.f32 %v338
  %vm345 = vmor %vm343, %vm344
  %v346 = vsel %vm345, %v338, %v342
  %v347 = vand.u32 2147483647, %v301
  %vm348 = vcmp.eq.f32.partialorder %v347, 8.507059e+37
  %v349 = vand.u32 %v301, 2147483648
  %v350 = vor.u32 1.1754944e-38, %v349
  %v351 = vsel %vm348, %v350, %v346
  %v352 = vmul.f32 %v288, %v351
  %v353 = vrcp.pop %v304
  %v354 = vmul.f32 %v304, %v353
  %v355 = vsub.f32 1.0, %v354
  %v356 = vmul.f32 %v353, %v355
  %v357 = vadd.f32 %v353, %v356
  %vm358 = vweird.f32 %v304
  %vm359 = vweird.f32 %v353
  %vm360 = vmor %vm358, %vm359
  %v361 = vsel %vm360, %v353, %v357
  %v362 = vand.u32 2147483647, %v304
  %vm363 = vcmp.eq.f32.partialorder %v362, 8.507059e+37
  %v364 = vand.u32 %v304, 2147483648
  %v365 = vor.u32 1.1754944e-38, %v364
  %v366 = vsel %vm363, %v365, %v361
  %v367 = vmul.f32 %v290, %v366
  %v368 = vrcp.pop %v307
  %v369 = vmul.f32 %v307, %v368
  %v370 = vsub.f32 1.0, %v369
  %v371 = vmul.f32 %v368, %v370
  %v372 = vadd.f32 %v368, %v371
  %vm373 = vweird.f32 %v307
  %vm374 = vweird.f32 %v368
  %vm375 = vmor %vm373, %vm374
  %v376 = vsel %vm375, %v368, %v372
  %v377 = vand.u32 2147483647, %v307
  %vm378 = vcmp.eq.f32.partialorder %v377, 8.507059e+37
  %v379 = vand.u32 %v307, 2147483648
  %v380 = vor.u32 1.1754944e-38, %v379
  %v381 = vsel %vm378, %v380, %v376
  %v382 = vmul.f32 %v292, %v381
  %v383 = vmul.f32 %v322, %v175
  %v384 = vmul.f32 %v337, %v258
  %v385 = vmul.f32 %v352, %v259
  %v386 = vmul.f32 %v367, %v260
  %v387 = vmul.f32 %v382, %v256
  %v388 = vsel %vm261, %v383, 0.0
  %389 = vadd.xlane.f32.xlu0 %v388
  %v390 = vpop.xlane.xlu0 %389
  %v391 = vsel %vm261, %v384, 0.0
  %392 = vadd.xlane.f32.xlu0 %v391
  %v393 = vpop.xlane.xlu0 %392
  %v394 = vsel %vm261, %v385, 0.0
  %395 = vadd.xlane.f32.xlu0 %v394
  %v396 = vpop.xlane.xlu0 %395
  %v397 = vsel %vm261, %v386, 0.0
  %398 = vadd.xlane.f32.xlu0 %v397
  %v399 = vpop.xlane.xlu0 %398
  %v400 = vsel %vm274, %v387, 0.0
  %401 = vadd.xlane.f32.xlu0 %v400
  %v402 = vpop.xlane.xlu0 %401
  %v403 = vld [vmem:[%s2 + $0x10] sm:$0x3]
  %v404 = vperm.slane %v403, 0
  %v405 = vmul.f32 %v390, %v404
  %v406 = vmul.f32 %v393, %v404
  %v407 = vperm.slane %v403, 1
  %v408 = vmul.f32 %v393, %v407
  %v409 = vmul.f32 %v396, %v407
  %vm412 = vcmask 1046528
  %v413 = vrot.slane %v408, 1
  %v414 = vrot.slane %v409, 1
  %v415 = vsel %vm412, %v413, %v414
  %v418 = vadd.f32 %v405, %v415
  %v419 = vadd.f32 %v406, %v414
  %v420 = vld [vmem:[%s2 + $0x13] sm:$0x1]
  %v421 = vperm.slane %v420, 0
  %v422 = vadd.f32 %v418, %v421
  %v423 = vadd.f32 %v419, %v421
  %v424 = vmul.f32 %v396, %v404
  %v425 = vmul.f32 %v399, %v404
  %v426 = vmul.f32 %v399, %v407
  %v427 = vmul.f32 %v402, %v407
  %v430 = vrot.slane %v426, 1
  %v431 = vrot.slane %v427, 1
  %v432 = vsel %vm412, %v430, %v431
  %v435 = vadd.f32 %v424, %v432
  %v436 = vadd.f32 %v425, %v431
  %v437 = vadd.f32 %v435, %v421
  %v438 = vadd.f32 %v436, %v421
  %v441 = vrot.slane %v437, 1
  %v442 = vrot.slane %v438, 1
  %v443 = vsel %vm412, %v441, %v442
  %v446 = vsel %vm197, %v423, %v443
  %v447 = vadd.f32 %v62, %v422
  %v448 = vadd.f32 %v63, %v446
  %v449 = vadd.f32 %v64, %v442
  %v450 = vld [vmem:[%s2 + $0x15] sm:$0x1]
  %v451 = vld [vmem:[%s2 + $0x16] sm:$0x1]
  %455 = vrot.lane.b32.xlu0 %v447, 127
  %v456 = vpop.permute.xlu0 %455
  %457 = vrot.lane.b32.xlu0 %v448, 127
  %v458 = vpop.permute.xlu0 %457
  %459 = vrot.lane.b32.xlu0 %v449, 127
  %v460 = vpop.permute.xlu0 %459
  %v464 = vsub.f32 %v447, %v456
  %v465 = vsub.f32 %v448, %v458
  %v466 = vsub.f32 %v449, %v460
  %v467 = vmul.f32 %v464, 0.5
  %v468 = vmul.f32 %v465, 0.5
  %v469 = vmul.f32 %v466, 0.5
  %v470 = vmul.f32 %v467, %v467
  %v471 = vmul.f32 %v468, %v468
  %v472 = vmul.f32 %v469, %v469
  %v473 = vadd.f32 %v470, 1e-05
  %v474 = vadd.f32 %v471, 1e-05
  %v475 = vadd.f32 %v472, 1e-05
  %v476 = vrsqrt.pop %v473
  %v477 = vmul.f32 %v476, %v473
  %v478 = vmul.f32 %v477, %v476
  %v479 = vmul.f32 0.5, %v478
  %v480 = vsub.f32 1.5, %v479
  %v481 = vmul.f32 %v476, %v480
  %vm482 = vweird.f32 %v473
  %vm483 = vweird.f32 %v476
  %vm484 = vmor %vm482, %vm483
  %v485 = vsel %vm484, %v476, %v481
  %v486 = vrsqrt.pop %v474
  %v487 = vmul.f32 %v486, %v474
  %v488 = vmul.f32 %v487, %v486
  %v489 = vmul.f32 0.5, %v488
  %v490 = vsub.f32 1.5, %v489
  %v491 = vmul.f32 %v486, %v490
  %vm492 = vweird.f32 %v474
  %vm493 = vweird.f32 %v486
  %vm494 = vmor %vm492, %vm493
  %v495 = vsel %vm494, %v486, %v491
  %v496 = vrsqrt.pop %v475
  %v497 = vmul.f32 %v496, %v475
  %v498 = vmul.f32 %v497, %v496
  %v499 = vmul.f32 0.5, %v498
  %v500 = vsub.f32 1.5, %v499
  %v501 = vmul.f32 %v496, %v500
  %vm502 = vweird.f32 %v475
  %vm503 = vweird.f32 %v496
  %vm504 = vmor %vm502, %vm503
  %v505 = vsel %vm504, %v496, %v501
  %v506 = vmul.f32 %v467, %v485
  %v507 = vmul.f32 %v468, %v495
  %v508 = vmul.f32 %v469, %v505
  %v509 = vsub.f32 0.0, %v506
  %v510 = vsub.f32 0.0, %v507
  %v511 = vsub.f32 0.0, %v508
  %515 = vrot.lane.b32.xlu0 %v509, 1
  %v516 = vpop.permute.xlu0 %515
  %517 = vrot.lane.b32.xlu0 %v510, 1
  %v518 = vpop.permute.xlu0 %517
  %519 = vrot.lane.b32.xlu0 %v511, 1
  %v520 = vpop.permute.xlu0 %519
  %v524 = vsel %vm46, %v506, %v516
  %v525 = vsel %vm46, %v507, %v518
  %v526 = vsel %vm46, %v508, %v520
  %v527 = vperm.slane %v450, 0
  %v528 = vmul.f32 %v524, %v527
  %v529 = vmul.f32 %v525, %v527
  %v530 = vmul.f32 %v526, %v527
  %v531 = vperm.slane %v451, 0
  %v532 = vadd.f32 %v528, %v531
  %v533 = vadd.f32 %v529, %v531
  %v534 = vadd.f32 %v530, %v531
  %v535 = vld [vmem:[%s2 + $0x14] sm:$0x1]
  %v536 = vperm.slane %v535, 0
  %v537 = vadd.f32 %v532, %v536
  %v538 = vadd.f32 %v533, %v536
  %v539 = vadd.f32 %v534, %v536
  %v540 = vld [vmem:[%s2 + $0x17] sm:$0x1]
  %v541 = vld [vmem:[%s2 + $0x18] sm:$0x1]
  %545 = vrot.lane.b32.xlu0 %v537, 127
  %v546 = vpop.permute.xlu0 %545
  %547 = vrot.lane.b32.xlu0 %v538, 127
  %v548 = vpop.permute.xlu0 %547
  %549 = vrot.lane.b32.xlu0 %v539, 127
  %v550 = vpop.permute.xlu0 %549
  %v554 = vsub.f32 %v537, %v546
  %v555 = vsub.f32 %v538, %v548
  %v556 = vsub.f32 %v539, %v550
  %v557 = vmul.f32 %v554, 0.5
  %v558 = vmul.f32 %v555, 0.5
  %v559 = vmul.f32 %v556, 0.5
  %v560 = vmul.f32 %v557, %v557
  %v561 = vmul.f32 %v558, %v558
  %v562 = vmul.f32 %v559, %v559
  %v563 = vadd.f32 %v560, 1e-05
  %v564 = vadd.f32 %v561, 1e-05
  %v565 = vadd.f32 %v562, 1e-05
  %v566 = vrsqrt.pop %v563
  %v567 = vmul.f32 %v566, %v563
  %v568 = vmul.f32 %v567, %v566
  %v569 = vmul.f32 0.5, %v568
  %v570 = vsub.f32 1.5, %v569
  %v571 = vmul.f32 %v566, %v570
  %vm572 = vweird.f32 %v563
  %vm573 = vweird.f32 %v566
  %vm574 = vmor %vm572, %vm573
  %v575 = vsel %vm574, %v566, %v571
  %v576 = vrsqrt.pop %v564
  %v577 = vmul.f32 %v576, %v564
  %v578 = vmul.f32 %v577, %v576
  %v579 = vmul.f32 0.5, %v578
  %v580 = vsub.f32 1.5, %v579
  %v581 = vmul.f32 %v576, %v580
  %vm582 = vweird.f32 %v564
  %vm583 = vweird.f32 %v576
  %vm584 = vmor %vm582, %vm583
  %v585 = vsel %vm584, %v576, %v581
  %v586 = vrsqrt.pop %v565
  %v587 = vmul.f32 %v586, %v565
  %v588 = vmul.f32 %v587, %v586
  %v589 = vmul.f32 0.5, %v588
  %v590 = vsub.f32 1.5, %v589
  %v591 = vmul.f32 %v586, %v590
  %vm592 = vweird.f32 %v565
  %vm593 = vweird.f32 %v586
  %vm594 = vmor %vm592, %vm593
  %v595 = vsel %vm594, %v586, %v591
  %v596 = vmul.f32 %v557, %v575
  %v597 = vmul.f32 %v558, %v585
  %v598 = vmul.f32 %v559, %v595
  %v599 = vsub.f32 0.0, %v596
  %v600 = vsub.f32 0.0, %v597
  %v601 = vsub.f32 0.0, %v598
  %605 = vrot.lane.b32.xlu0 %v599, 1
  %v606 = vpop.permute.xlu0 %605
  %607 = vrot.lane.b32.xlu0 %v600, 1
  %v608 = vpop.permute.xlu0 %607
  %609 = vrot.lane.b32.xlu0 %v601, 1
  %v610 = vpop.permute.xlu0 %609
  %v614 = vsel %vm46, %v596, %v606
  %v615 = vsel %vm46, %v597, %v608
  %v616 = vsel %vm46, %v598, %v610
  %v617 = vperm.slane %v540, 0
  %v618 = vmul.f32 %v614, %v617
  %v619 = vmul.f32 %v615, %v617
  %v620 = vmul.f32 %v616, %v617
  %v621 = vperm.slane %v541, 0
  %v622 = vadd.f32 %v618, %v621
  %v623 = vadd.f32 %v619, %v621
  %v624 = vadd.f32 %v620, %v621
  %v625 = vld [vmem:[%s1] ss:$8 sm:$0xf]
  %v626 = vld [vmem:[%s1] ss:$8 sm:$0xf0]
  %v627 = vor.u32 %v625, %v626
  %s628 = scalar_lea.vmem %s1, 64
  %v629 = vld [vmem:[%s628] ss:$8 sm:$0xf]
  %v630 = vld [vmem:[%s628] ss:$8 sm:$0xf0]
  %v631 = vor.u32 %v629, %v630
  %633 = vset.pattern.permute.xlu0 0
  %634 = vperm.xlu0 %633, %v622
  %v635 = vpop.permute.xlu0 %634
  %638 = vset.pattern.permute.xlu0 0
  %639 = vperm.xlu0 %638, %v623
  %v640 = vpop.permute.xlu0 %639
  %643 = vset.pattern.permute.xlu0 0
  %644 = vperm.xlu0 %643, %v624
  %v645 = vpop.permute.xlu0 %644
  %v649 = vperm.slane %v627, 0
  %v650 = vperm.slane %v627, 1
  %v651 = vperm.slane %v627, 2
  %v652 = vperm.slane %v627, 3
  %v653 = vperm.slane %v627, 4
  %v654 = vperm.slane %v627, 5
  %v655 = vperm.slane %v627, 6
  %v656 = vperm.slane %v627, 7
  %v657 = vperm.slane %v631, 0
  %v658 = vperm.slane %v631, 1
  %v659 = vperm.slane %v631, 2
  %v660 = vperm.slane %v631, 3
  %v661 = vperm.slane %v631, 4
  %v662 = vperm.slane %v631, 5
  %v663 = vperm.slane %v631, 6
  %v664 = vperm.slane %v631, 7
  %v681 = vmul.f32 %v635, %v649
  %v682 = vmul.f32 %v635, %v650
  %v683 = vmul.f32 %v635, %v651
  %v684 = vmul.f32 %v635, %v652
  %v685 = vmul.f32 %v635, %v653
  %v686 = vmul.f32 %v635, %v654
  %v687 = vmul.f32 %v635, %v655
  %v688 = vmul.f32 %v635, %v656
  %v689 = vmul.f32 %v635, %v657
  %v690 = vmul.f32 %v635, %v658
  %v691 = vmul.f32 %v635, %v659
  %v692 = vmul.f32 %v635, %v660
  %v693 = vmul.f32 %v635, %v661
  %v694 = vmul.f32 %v635, %v662
  %v695 = vmul.f32 %v635, %v663
  %v696 = vmul.f32 %v635, %v664
  %v697 = vmul.f32 %v640, %v649
  %v698 = vmul.f32 %v640, %v650
  %v699 = vmul.f32 %v640, %v651
  %v700 = vmul.f32 %v640, %v652
  %v701 = vmul.f32 %v640, %v653
  %v702 = vmul.f32 %v640, %v654
  %v703 = vmul.f32 %v640, %v655
  %v704 = vmul.f32 %v640, %v656
  %v705 = vmul.f32 %v640, %v657
  %v706 = vmul.f32 %v640, %v658
  %v707 = vmul.f32 %v640, %v659
  %v708 = vmul.f32 %v640, %v660
  %v709 = vmul.f32 %v640, %v661
  %v710 = vmul.f32 %v640, %v662
  %v711 = vmul.f32 %v640, %v663
  %v712 = vmul.f32 %v640, %v664
  %v713 = vmul.f32 %v645, %v649
  %v714 = vmul.f32 %v645, %v650
  %v715 = vmul.f32 %v645, %v651
  %v716 = vmul.f32 %v645, %v652
  %v717 = vmul.f32 %v645, %v653
  %v718 = vmul.f32 %v645, %v654
  %v719 = vmul.f32 %v645, %v655
  %v720 = vmul.f32 %v645, %v656
  %v721 = vmul.f32 %v645, %v657
  %v722 = vmul.f32 %v645, %v658
  %v723 = vmul.f32 %v645, %v659
  %v724 = vmul.f32 %v645, %v660
  %v725 = vmul.f32 %v645, %v661
  %v726 = vmul.f32 %v645, %v662
  %v727 = vmul.f32 %v645, %v663
  %v728 = vmul.f32 %v645, %v664
  %s729 = scalar_lea.vmem %s1, 1
  %v730 = vld [vmem:[%s729] ss:$8 sm:$0xf]
  %v731 = vld [vmem:[%s729] ss:$8 sm:$0xf0]
  %v732 = vor.u32 %v730, %v731
  %s733 = scalar_lea.vmem %s1, 65
  %v734 = vld [vmem:[%s733] ss:$8 sm:$0xf]
  %v735 = vld [vmem:[%s733] ss:$8 sm:$0xf0]
  %v736 = vor.u32 %v734, %v735
  %737 = vset.pattern.permute.xlu0 1
  %738 = vperm.xlu0 %737, %v622
  %v739 = vpop.permute.xlu0 %738
  %741 = vset.pattern.permute.xlu0 1
  %742 = vperm.xlu0 %741, %v623
  %v743 = vpop.permute.xlu0 %742
  %745 = vset.pattern.permute.xlu0 1
  %746 = vperm.xlu0 %745, %v624
  %v747 = vpop.permute.xlu0 %746
  %v751 = vperm.slane %v732, 0
  %v752 = vperm.slane %v732, 1
  %v753 = vperm.slane %v732, 2
  %v754 = vperm.slane %v732, 3
  %v755 = vperm.slane %v732, 4
  %v756 = vperm.slane %v732, 5
  %v757 = vperm.slane %v732, 6
  %v758 = vperm.slane %v732, 7
  %v759 = vperm.slane %v736, 0
  %v760 = vperm.slane %v736, 1
  %v761 = vperm.slane %v736, 2
  %v762 = vperm.slane %v736, 3
  %v763 = vperm.slane %v736, 4
  %v764 = vperm.slane %v736, 5
  %v765 = vperm.slane %v736, 6
  %v766 = vperm.slane %v736, 7
  %v783 = vmul.f32 %v739, %v751
  %v784 = vmul.f32 %v739, %v752
  %v785 = vmul.f32 %v739, %v753
  %v786 = vmul.f32 %v739, %v754
  %v787 = vmul.f32 %v739, %v755
  %v788 = vmul.f32 %v739, %v756
  %v789 = vmul.f32 %v739, %v757
  %v790 = vmul.f32 %v739, %v758
  %v791 = vmul.f32 %v739, %v759
  %v792 = vmul.f32 %v739, %v760
  %v793 = vmul.f32 %v739, %v761
  %v794 = vmul.f32 %v739, %v762
  %v795 = vmul.f32 %v739, %v763
  %v796 = vmul.f32 %v739, %v764
  %v797 = vmul.f32 %v739, %v765
  %v798 = vmul.f32 %v739, %v766
  %v799 = vmul.f32 %v743, %v751
  %v800 = vmul.f32 %v743, %v752
  %v801 = vmul.f32 %v743, %v753
  %v802 = vmul.f32 %v743, %v754
  %v803 = vmul.f32 %v743, %v755
  %v804 = vmul.f32 %v743, %v756
  %v805 = vmul.f32 %v743, %v757
  %v806 = vmul.f32 %v743, %v758
  %v807 = vmul.f32 %v743, %v759
  %v808 = vmul.f32 %v743, %v760
  %v809 = vmul.f32 %v743, %v761
  %v810 = vmul.f32 %v743, %v762
  %v811 = vmul.f32 %v743, %v763
  %v812 = vmul.f32 %v743, %v764
  %v813 = vmul.f32 %v743, %v765
  %v814 = vmul.f32 %v743, %v766
  %v815 = vmul.f32 %v747, %v751
  %v816 = vmul.f32 %v747, %v752
  %v817 = vmul.f32 %v747, %v753
  %v818 = vmul.f32 %v747, %v754
  %v819 = vmul.f32 %v747, %v755
  %v820 = vmul.f32 %v747, %v756
  %v821 = vmul.f32 %v747, %v757
  %v822 = vmul.f32 %v747, %v758
  %v823 = vmul.f32 %v747, %v759
  %v824 = vmul.f32 %v747, %v760
  %v825 = vmul.f32 %v747, %v761
  %v826 = vmul.f32 %v747, %v762
  %v827 = vmul.f32 %v747, %v763
  %v828 = vmul.f32 %v747, %v764
  %v829 = vmul.f32 %v747, %v765
  %v830 = vmul.f32 %v747, %v766
  %v831 = vadd.f32 %v681, %v783
  %v832 = vadd.f32 %v682, %v784
  %v833 = vadd.f32 %v683, %v785
  %v834 = vadd.f32 %v684, %v786
  %v835 = vadd.f32 %v685, %v787
  %v836 = vadd.f32 %v686, %v788
  %v837 = vadd.f32 %v687, %v789
  %v838 = vadd.f32 %v688, %v790
  %v839 = vadd.f32 %v689, %v791
  %v840 = vadd.f32 %v690, %v792
  %v841 = vadd.f32 %v691, %v793
  %v842 = vadd.f32 %v692, %v794
  %v843 = vadd.f32 %v693, %v795
  %v844 = vadd.f32 %v694, %v796
  %v845 = vadd.f32 %v695, %v797
  %v846 = vadd.f32 %v696, %v798
  %v847 = vadd.f32 %v697, %v799
  %v848 = vadd.f32 %v698, %v800
  %v849 = vadd.f32 %v699, %v801
  %v850 = vadd.f32 %v700, %v802
  %v851 = vadd.f32 %v701, %v803
  %v852 = vadd.f32 %v702, %v804
  %v853 = vadd.f32 %v703, %v805
  %v854 = vadd.f32 %v704, %v806
  %v855 = vadd.f32 %v705, %v807
  %v856 = vadd.f32 %v706, %v808
  %v857 = vadd.f32 %v707, %v809
  %v858 = vadd.f32 %v708, %v810
  %v859 = vadd.f32 %v709, %v811
  %v860 = vadd.f32 %v710, %v812
  %v861 = vadd.f32 %v711, %v813
  %v862 = vadd.f32 %v712, %v814
  %v863 = vadd.f32 %v713, %v815
  %v864 = vadd.f32 %v714, %v816
  %v865 = vadd.f32 %v715, %v817
  %v866 = vadd.f32 %v716, %v818
  %v867 = vadd.f32 %v717, %v819
  %v868 = vadd.f32 %v718, %v820
  %v869 = vadd.f32 %v719, %v821
  %v870 = vadd.f32 %v720, %v822
  %v871 = vadd.f32 %v721, %v823
  %v872 = vadd.f32 %v722, %v824
  %v873 = vadd.f32 %v723, %v825
  %v874 = vadd.f32 %v724, %v826
  %v875 = vadd.f32 %v725, %v827
  %v876 = vadd.f32 %v726, %v828
  %v877 = vadd.f32 %v727, %v829
  %v878 = vadd.f32 %v728, %v830
  %s879 = scalar_lea.vmem %s1, 2
  %v880 = vld [vmem:[%s879] ss:$8 sm:$0xf]
  %v881 = vld [vmem:[%s879] ss:$8 sm:$0xf0]
  %v882 = vor.u32 %v880, %v881
  %s883 = scalar_lea.vmem %s1, 66
  %v884 = vld [vmem:[%s883] ss:$8 sm:$0xf]
  %v885 = vld [vmem:[%s883] ss:$8 sm:$0xf0]
  %v886 = vor.u32 %v884, %v885
  %v889 = vperm.slane %v882, 0
  %v890 = vperm.slane %v882, 1
  %v891 = vperm.slane %v882, 2
  %v892 = vperm.slane %v882, 3
  %v893 = vperm.slane %v882, 4
  %v894 = vperm.slane %v882, 5
  %v895 = vperm.slane %v882, 6
  %v896 = vperm.slane %v882, 7
  %v897 = vperm.slane %v886, 0
  %v898 = vperm.slane %v886, 1
  %v899 = vperm.slane %v886, 2
  %v900 = vperm.slane %v886, 3
  %v901 = vperm.slane %v886, 4
  %v902 = vperm.slane %v886, 5
  %v903 = vperm.slane %v886, 6
  %v904 = vperm.slane %v886, 7
  %v921 = vadd.f32 %v831, %v889
  %v922 = vadd.f32 %v832, %v890
  %v923 = vadd.f32 %v833, %v891
  %v924 = vadd.f32 %v834, %v892
  %v925 = vadd.f32 %v835, %v893
  %v926 = vadd.f32 %v836, %v894
  %v927 = vadd.f32 %v837, %v895
  %v928 = vadd.f32 %v838, %v896
  %v929 = vadd.f32 %v839, %v897
  %v930 = vadd.f32 %v840, %v898
  %v931 = vadd.f32 %v841, %v899
  %v932 = vadd.f32 %v842, %v900
  %v933 = vadd.f32 %v843, %v901
  %v934 = vadd.f32 %v844, %v902
  %v935 = vadd.f32 %v845, %v903
  %v936 = vadd.f32 %v846, %v904
  %v937 = vadd.f32 %v847, %v889
  %v938 = vadd.f32 %v848, %v890
  %v939 = vadd.f32 %v849, %v891
  %v940 = vadd.f32 %v850, %v892
  %v941 = vadd.f32 %v851, %v893
  %v942 = vadd.f32 %v852, %v894
  %v943 = vadd.f32 %v853, %v895
  %v944 = vadd.f32 %v854, %v896
  %v945 = vadd.f32 %v855, %v897
  %v946 = vadd.f32 %v856, %v898
  %v947 = vadd.f32 %v857, %v899
  %v948 = vadd.f32 %v858, %v900
  %v949 = vadd.f32 %v859, %v901
  %v950 = vadd.f32 %v860, %v902
  %v951 = vadd.f32 %v861, %v903
  %v952 = vadd.f32 %v862, %v904
  %v953 = vadd.f32 %v863, %v889
  %v954 = vadd.f32 %v864, %v890
  %v955 = vadd.f32 %v865, %v891
  %v956 = vadd.f32 %v866, %v892
  %v957 = vadd.f32 %v867, %v893
  %v958 = vadd.f32 %v868, %v894
  %v959 = vadd.f32 %v869, %v895
  %v960 = vadd.f32 %v870, %v896
  %v961 = vadd.f32 %v871, %v897
  %v962 = vadd.f32 %v872, %v898
  %v963 = vadd.f32 %v873, %v899
  %v964 = vadd.f32 %v874, %v900
  %v965 = vadd.f32 %v875, %v901
  %v966 = vadd.f32 %v876, %v902
  %v967 = vadd.f32 %v877, %v903
  %v968 = vadd.f32 %v878, %v904
  %v969 = vmax.f32 %v921, 0.0
  %v970 = vmax.f32 %v922, 0.0
  %v971 = vmax.f32 %v923, 0.0
  %v972 = vmax.f32 %v924, 0.0
  %v973 = vmax.f32 %v925, 0.0
  %v974 = vmax.f32 %v926, 0.0
  %v975 = vmax.f32 %v927, 0.0
  %v976 = vmax.f32 %v928, 0.0
  %v977 = vmax.f32 %v929, 0.0
  %v978 = vmax.f32 %v930, 0.0
  %v979 = vmax.f32 %v931, 0.0
  %v980 = vmax.f32 %v932, 0.0
  %v981 = vmax.f32 %v933, 0.0
  %v982 = vmax.f32 %v934, 0.0
  %v983 = vmax.f32 %v935, 0.0
  %v984 = vmax.f32 %v936, 0.0
  %v985 = vmax.f32 %v937, 0.0
  %v986 = vmax.f32 %v938, 0.0
  %v987 = vmax.f32 %v939, 0.0
  %v988 = vmax.f32 %v940, 0.0
  %v989 = vmax.f32 %v941, 0.0
  %v990 = vmax.f32 %v942, 0.0
  %v991 = vmax.f32 %v943, 0.0
  %v992 = vmax.f32 %v944, 0.0
  %v993 = vmax.f32 %v945, 0.0
  %v994 = vmax.f32 %v946, 0.0
  %v995 = vmax.f32 %v947, 0.0
  %v996 = vmax.f32 %v948, 0.0
  %v997 = vmax.f32 %v949, 0.0
  %v998 = vmax.f32 %v950, 0.0
  %v999 = vmax.f32 %v951, 0.0
  %v1000 = vmax.f32 %v952, 0.0
  %v1001 = vmax.f32 %v953, 0.0
  %v1002 = vmax.f32 %v954, 0.0
  %v1003 = vmax.f32 %v955, 0.0
  %v1004 = vmax.f32 %v956, 0.0
  %v1005 = vmax.f32 %v957, 0.0
  %v1006 = vmax.f32 %v958, 0.0
  %v1007 = vmax.f32 %v959, 0.0
  %v1008 = vmax.f32 %v960, 0.0
  %v1009 = vmax.f32 %v961, 0.0
  %v1010 = vmax.f32 %v962, 0.0
  %v1011 = vmax.f32 %v963, 0.0
  %v1012 = vmax.f32 %v964, 0.0
  %v1013 = vmax.f32 %v965, 0.0
  %v1014 = vmax.f32 %v966, 0.0
  %v1015 = vmax.f32 %v967, 0.0
  %v1016 = vmax.f32 %v968, 0.0
  %v1017 = vld [vmem:[%s1] sm:$0x18]
  %v1018 = vld [vmem:[%s1 + $0x8] sm:$0x18]
  %v1019 = vld [vmem:[%s1 + $0x10] sm:$0x18]
  %v1020 = vld [vmem:[%s1 + $0x18] sm:$0x18]
  %v1021 = vld [vmem:[%s1 + $0x20] sm:$0x18]
  %v1022 = vld [vmem:[%s1 + $0x28] sm:$0x18]
  %v1023 = vld [vmem:[%s1 + $0x30] sm:$0x18]
  %v1024 = vld [vmem:[%s1 + $0x38] sm:$0x18]
  %v1025 = vld [vmem:[%s1 + $0x40] sm:$0x18]
  %v1026 = vld [vmem:[%s1 + $0x48] sm:$0x18]
  %v1027 = vld [vmem:[%s1 + $0x50] sm:$0x18]
  %v1028 = vld [vmem:[%s1 + $0x58] sm:$0x18]
  %v1029 = vld [vmem:[%s1 + $0x60] sm:$0x18]
  %v1030 = vld [vmem:[%s1 + $0x68] sm:$0x18]
  %v1031 = vld [vmem:[%s1 + $0x70] sm:$0x18]
  %v1032 = vld [vmem:[%s1 + $0x78] sm:$0x18]
  %v1033 = vld [vmem:[%s2 + $0x1b] sm:$0x1]
  %v1034 = vperm.slane %v1017, 3
  %v1035 = vperm.slane %v1018, 3
  %v1036 = vperm.slane %v1019, 3
  %v1037 = vperm.slane %v1020, 3
  %v1038 = vperm.slane %v1021, 3
  %v1039 = vperm.slane %v1022, 3
  %v1040 = vperm.slane %v1023, 3
  %v1041 = vperm.slane %v1024, 3
  %v1042 = vperm.slane %v1025, 3
  %v1043 = vperm.slane %v1026, 3
  %v1044 = vperm.slane %v1027, 3
  %v1045 = vperm.slane %v1028, 3
  %v1046 = vperm.slane %v1029, 3
  %v1047 = vperm.slane %v1030, 3
  %v1048 = vperm.slane %v1031, 3
  %v1049 = vperm.slane %v1032, 3
  %v1050 = vmul.f32 %v969, %v1034
  %v1051 = vmul.f32 %v970, %v1035
  %v1052 = vmul.f32 %v971, %v1036
  %v1053 = vmul.f32 %v972, %v1037
  %v1054 = vmul.f32 %v973, %v1038
  %v1055 = vmul.f32 %v974, %v1039
  %v1056 = vmul.f32 %v975, %v1040
  %v1057 = vmul.f32 %v976, %v1041
  %v1058 = vmul.f32 %v977, %v1042
  %v1059 = vmul.f32 %v978, %v1043
  %v1060 = vmul.f32 %v979, %v1044
  %v1061 = vmul.f32 %v980, %v1045
  %v1062 = vmul.f32 %v981, %v1046
  %v1063 = vmul.f32 %v982, %v1047
  %v1064 = vmul.f32 %v983, %v1048
  %v1065 = vmul.f32 %v984, %v1049
  %v1066 = vmul.f32 %v985, %v1034
  %v1067 = vmul.f32 %v986, %v1035
  %v1068 = vmul.f32 %v987, %v1036
  %v1069 = vmul.f32 %v988, %v1037
  %v1070 = vmul.f32 %v989, %v1038
  %v1071 = vmul.f32 %v990, %v1039
  %v1072 = vmul.f32 %v991, %v1040
  %v1073 = vmul.f32 %v992, %v1041
  %v1074 = vmul.f32 %v993, %v1042
  %v1075 = vmul.f32 %v994, %v1043
  %v1076 = vmul.f32 %v995, %v1044
  %v1077 = vmul.f32 %v996, %v1045
  %v1078 = vmul.f32 %v997, %v1046
  %v1079 = vmul.f32 %v998, %v1047
  %v1080 = vmul.f32 %v999, %v1048
  %v1081 = vmul.f32 %v1000, %v1049
  %v1082 = vmul.f32 %v1001, %v1034
  %v1083 = vmul.f32 %v1002, %v1035
  %v1084 = vmul.f32 %v1003, %v1036
  %v1085 = vmul.f32 %v1004, %v1037
  %v1086 = vmul.f32 %v1005, %v1038
  %v1087 = vmul.f32 %v1006, %v1039
  %v1088 = vmul.f32 %v1007, %v1040
  %v1089 = vmul.f32 %v1008, %v1041
  %v1090 = vmul.f32 %v1009, %v1042
  %v1091 = vmul.f32 %v1010, %v1043
  %v1092 = vmul.f32 %v1011, %v1044
  %v1093 = vmul.f32 %v1012, %v1045
  %v1094 = vmul.f32 %v1013, %v1046
  %v1095 = vmul.f32 %v1014, %v1047
  %v1096 = vmul.f32 %v1015, %v1048
  %v1097 = vmul.f32 %v1016, %v1049
  %v1098 = vadd.f32 %v1050, %v1051
  %v1099 = vadd.f32 %v1098, %v1052
  %v1100 = vadd.f32 %v1099, %v1053
  %v1101 = vadd.f32 %v1100, %v1054
  %v1102 = vadd.f32 %v1101, %v1055
  %v1103 = vadd.f32 %v1102, %v1056
  %v1104 = vadd.f32 %v1103, %v1057
  %v1105 = vadd.f32 %v1104, %v1058
  %v1106 = vadd.f32 %v1105, %v1059
  %v1107 = vadd.f32 %v1106, %v1060
  %v1108 = vadd.f32 %v1107, %v1061
  %v1109 = vadd.f32 %v1108, %v1062
  %v1110 = vadd.f32 %v1109, %v1063
  %v1111 = vadd.f32 %v1110, %v1064
  %v1112 = vadd.f32 %v1111, %v1065
  %1113 = vadd.xlane.f32.xlu0 %v1112
  %v1114 = vpop.xlane.xlu0 %1113
  %v1115 = vadd.f32 %v1066, %v1067
  %v1116 = vadd.f32 %v1115, %v1068
  %v1117 = vadd.f32 %v1116, %v1069
  %v1118 = vadd.f32 %v1117, %v1070
  %v1119 = vadd.f32 %v1118, %v1071
  %v1120 = vadd.f32 %v1119, %v1072
  %v1121 = vadd.f32 %v1120, %v1073
  %v1122 = vadd.f32 %v1121, %v1074
  %v1123 = vadd.f32 %v1122, %v1075
  %v1124 = vadd.f32 %v1123, %v1076
  %v1125 = vadd.f32 %v1124, %v1077
  %v1126 = vadd.f32 %v1125, %v1078
  %v1127 = vadd.f32 %v1126, %v1079
  %v1128 = vadd.f32 %v1127, %v1080
  %v1129 = vadd.f32 %v1128, %v1081
  %1130 = vadd.xlane.f32.xlu0 %v1129
  %v1131 = vpop.xlane.xlu0 %1130
  %v1132 = vsel %vm236, %v1082, 0.0
  %v1133 = vsel %vm236, %v1083, 0.0
  %v1134 = vadd.f32 %v1132, %v1133
  %v1135 = vsel %vm236, %v1084, 0.0
  %v1136 = vadd.f32 %v1134, %v1135
  %v1137 = vsel %vm236, %v1085, 0.0
  %v1138 = vadd.f32 %v1136, %v1137
  %v1139 = vsel %vm236, %v1086, 0.0
  %v1140 = vadd.f32 %v1138, %v1139
  %v1141 = vsel %vm236, %v1087, 0.0
  %v1142 = vadd.f32 %v1140, %v1141
  %v1143 = vsel %vm236, %v1088, 0.0
  %v1144 = vadd.f32 %v1142, %v1143
  %v1145 = vsel %vm236, %v1089, 0.0
  %v1146 = vadd.f32 %v1144, %v1145
  %v1147 = vsel %vm236, %v1090, 0.0
  %v1148 = vadd.f32 %v1146, %v1147
  %v1149 = vsel %vm236, %v1091, 0.0
  %v1150 = vadd.f32 %v1148, %v1149
  %v1151 = vsel %vm236, %v1092, 0.0
  %v1152 = vadd.f32 %v1150, %v1151
  %v1153 = vsel %vm236, %v1093, 0.0
  %v1154 = vadd.f32 %v1152, %v1153
  %v1155 = vsel %vm236, %v1094, 0.0
  %v1156 = vadd.f32 %v1154, %v1155
  %v1157 = vsel %vm236, %v1095, 0.0
  %v1158 = vadd.f32 %v1156, %v1157
  %v1159 = vsel %vm236, %v1096, 0.0
  %v1160 = vadd.f32 %v1158, %v1159
  %v1161 = vsel %vm236, %v1097, 0.0
  %v1162 = vadd.f32 %v1160, %v1161
  %1163 = vadd.xlane.f32.xlu0 %v1162
  %v1164 = vpop.xlane.xlu0 %1163
  %v1165 = vperm.slane %v1017, 4
  %v1166 = vperm.slane %v1018, 4
  %v1167 = vperm.slane %v1019, 4
  %v1168 = vperm.slane %v1020, 4
  %v1169 = vperm.slane %v1021, 4
  %v1170 = vperm.slane %v1022, 4
  %v1171 = vperm.slane %v1023, 4
  %v1172 = vperm.slane %v1024, 4
  %v1173 = vperm.slane %v1025, 4
  %v1174 = vperm.slane %v1026, 4
  %v1175 = vperm.slane %v1027, 4
  %v1176 = vperm.slane %v1028, 4
  %v1177 = vperm.slane %v1029, 4
  %v1178 = vperm.slane %v1030, 4
  %v1179 = vperm.slane %v1031, 4
  %v1180 = vperm.slane %v1032, 4
  %v1181 = vmul.f32 %v969, %v1165
  %v1182 = vmul.f32 %v970, %v1166
  %v1183 = vmul.f32 %v971, %v1167
  %v1184 = vmul.f32 %v972, %v1168
  %v1185 = vmul.f32 %v973, %v1169
  %v1186 = vmul.f32 %v974, %v1170
  %v1187 = vmul.f32 %v975, %v1171
  %v1188 = vmul.f32 %v976, %v1172
  %v1189 = vmul.f32 %v977, %v1173
  %v1190 = vmul.f32 %v978, %v1174
  %v1191 = vmul.f32 %v979, %v1175
  %v1192 = vmul.f32 %v980, %v1176
  %v1193 = vmul.f32 %v981, %v1177
  %v1194 = vmul.f32 %v982, %v1178
  %v1195 = vmul.f32 %v983, %v1179
  %v1196 = vmul.f32 %v984, %v1180
  %v1197 = vmul.f32 %v985, %v1165
  %v1198 = vmul.f32 %v986, %v1166
  %v1199 = vmul.f32 %v987, %v1167
  %v1200 = vmul.f32 %v988, %v1168
  %v1201 = vmul.f32 %v989, %v1169
  %v1202 = vmul.f32 %v990, %v1170
  %v1203 = vmul.f32 %v991, %v1171
  %v1204 = vmul.f32 %v992, %v1172
  %v1205 = vmul.f32 %v993, %v1173
  %v1206 = vmul.f32 %v994, %v1174
  %v1207 = vmul.f32 %v995, %v1175
  %v1208 = vmul.f32 %v996, %v1176
  %v1209 = vmul.f32 %v997, %v1177
  %v1210 = vmul.f32 %v998, %v1178
  %v1211 = vmul.f32 %v999, %v1179
  %v1212 = vmul.f32 %v1000, %v1180
  %v1213 = vmul.f32 %v1001, %v1165
  %v1214 = vmul.f32 %v1002, %v1166
  %v1215 = vmul.f32 %v1003, %v1167
  %v1216 = vmul.f32 %v1004, %v1168
  %v1217 = vmul.f32 %v1005, %v1169
  %v1218 = vmul.f32 %v1006, %v1170
  %v1219 = vmul.f32 %v1007, %v1171
  %v1220 = vmul.f32 %v1008, %v1172
  %v1221 = vmul.f32 %v1009, %v1173
  %v1222 = vmul.f32 %v1010, %v1174
  %v1223 = vmul.f32 %v1011, %v1175
  %v1224 = vmul.f32 %v1012, %v1176
  %v1225 = vmul.f32 %v1013, %v1177
  %v1226 = vmul.f32 %v1014, %v1178
  %v1227 = vmul.f32 %v1015, %v1179
  %v1228 = vmul.f32 %v1016, %v1180
  %v1229 = vadd.f32 %v1181, %v1182
  %v1230 = vadd.f32 %v1229, %v1183
  %v1231 = vadd.f32 %v1230, %v1184
  %v1232 = vadd.f32 %v1231, %v1185
  %v1233 = vadd.f32 %v1232, %v1186
  %v1234 = vadd.f32 %v1233, %v1187
  %v1235 = vadd.f32 %v1234, %v1188
  %v1236 = vadd.f32 %v1235, %v1189
  %v1237 = vadd.f32 %v1236, %v1190
  %v1238 = vadd.f32 %v1237, %v1191
  %v1239 = vadd.f32 %v1238, %v1192
  %v1240 = vadd.f32 %v1239, %v1193
  %v1241 = vadd.f32 %v1240, %v1194
  %v1242 = vadd.f32 %v1241, %v1195
  %v1243 = vadd.f32 %v1242, %v1196
  %1244 = vadd.xlane.f32.xlu0 %v1243
  %v1245 = vpop.xlane.xlu0 %1244
  %v1246 = vadd.f32 %v1197, %v1198
  %v1247 = vadd.f32 %v1246, %v1199
  %v1248 = vadd.f32 %v1247, %v1200
  %v1249 = vadd.f32 %v1248, %v1201
  %v1250 = vadd.f32 %v1249, %v1202
  %v1251 = vadd.f32 %v1250, %v1203
  %v1252 = vadd.f32 %v1251, %v1204
  %v1253 = vadd.f32 %v1252, %v1205
  %v1254 = vadd.f32 %v1253, %v1206
  %v1255 = vadd.f32 %v1254, %v1207
  %v1256 = vadd.f32 %v1255, %v1208
  %v1257 = vadd.f32 %v1256, %v1209
  %v1258 = vadd.f32 %v1257, %v1210
  %v1259 = vadd.f32 %v1258, %v1211
  %v1260 = vadd.f32 %v1259, %v1212
  %1261 = vadd.xlane.f32.xlu0 %v1260
  %v1262 = vpop.xlane.xlu0 %1261
  %v1263 = vsel %vm236, %v1213, 0.0
  %v1264 = vsel %vm236, %v1214, 0.0
  %v1265 = vadd.f32 %v1263, %v1264
  %v1266 = vsel %vm236, %v1215, 0.0
  %v1267 = vadd.f32 %v1265, %v1266
  %v1268 = vsel %vm236, %v1216, 0.0
  %v1269 = vadd.f32 %v1267, %v1268
  %v1270 = vsel %vm236, %v1217, 0.0
  %v1271 = vadd.f32 %v1269, %v1270
  %v1272 = vsel %vm236, %v1218, 0.0
  %v1273 = vadd.f32 %v1271, %v1272
  %v1274 = vsel %vm236, %v1219, 0.0
  %v1275 = vadd.f32 %v1273, %v1274
  %v1276 = vsel %vm236, %v1220, 0.0
  %v1277 = vadd.f32 %v1275, %v1276
  %v1278 = vsel %vm236, %v1221, 0.0
  %v1279 = vadd.f32 %v1277, %v1278
  %v1280 = vsel %vm236, %v1222, 0.0
  %v1281 = vadd.f32 %v1279, %v1280
  %v1282 = vsel %vm236, %v1223, 0.0
  %v1283 = vadd.f32 %v1281, %v1282
  %v1284 = vsel %vm236, %v1224, 0.0
  %v1285 = vadd.f32 %v1283, %v1284
  %v1286 = vsel %vm236, %v1225, 0.0
  %v1287 = vadd.f32 %v1285, %v1286
  %v1288 = vsel %vm236, %v1226, 0.0
  %v1289 = vadd.f32 %v1287, %v1288
  %v1290 = vsel %vm236, %v1227, 0.0
  %v1291 = vadd.f32 %v1289, %v1290
  %v1292 = vsel %vm236, %v1228, 0.0
  %v1293 = vadd.f32 %v1291, %v1292
  %1294 = vadd.xlane.f32.xlu0 %v1293
  %v1295 = vpop.xlane.xlu0 %1294
  %v1296 = vsel %vm46, %v1114, %v1245
  %v1297 = vsel %vm46, %v1131, %v1262
  %v1298 = vsel %vm46, %v1164, %v1295
  %v1299 = vperm.slane %v1033, 0
  %v1300 = vadd.f32 %v1296, %v1299
  %v1301 = vadd.f32 %v1297, %v1299
  %v1302 = vadd.f32 %v1298, %v1299
  %v1303 = vadd.f32 %v622, %v1300
  %v1304 = vadd.f32 %v623, %v1301
  %v1305 = vadd.f32 %v624, %v1302
  %v1306 = vld [vmem:[%s2 + $0x19] sm:$0x1]
  %v1307 = vld [vmem:[%s2 + $0x1a] sm:$0x1]
  %1311 = vrot.lane.b32.xlu0 %v1303, 127
  %v1312 = vpop.permute.xlu0 %1311
  %1313 = vrot.lane.b32.xlu0 %v1304, 127
  %v1314 = vpop.permute.xlu0 %1313
  %1315 = vrot.lane.b32.xlu0 %v1305, 127
  %v1316 = vpop.permute.xlu0 %1315
  %v1320 = vsub.f32 %v1303, %v1312
  %v1321 = vsub.f32 %v1304, %v1314
  %v1322 = vsub.f32 %v1305, %v1316
  %v1323 = vmul.f32 %v1320, 0.5
  %v1324 = vmul.f32 %v1321, 0.5
  %v1325 = vmul.f32 %v1322, 0.5
  %v1326 = vmul.f32 %v1323, %v1323
  %v1327 = vmul.f32 %v1324, %v1324
  %v1328 = vmul.f32 %v1325, %v1325
  %v1329 = vadd.f32 %v1326, 1e-05
  %v1330 = vadd.f32 %v1327, 1e-05
  %v1331 = vadd.f32 %v1328, 1e-05
  %v1332 = vrsqrt.pop %v1329
  %v1333 = vmul.f32 %v1332, %v1329
  %v1334 = vmul.f32 %v1333, %v1332
  %v1335 = vmul.f32 0.5, %v1334
  %v1336 = vsub.f32 1.5, %v1335
  %v1337 = vmul.f32 %v1332, %v1336
  %vm1338 = vweird.f32 %v1329
  %vm1339 = vweird.f32 %v1332
  %vm1340 = vmor %vm1338, %vm1339
  %v1341 = vsel %vm1340, %v1332, %v1337
  %v1342 = vrsqrt.pop %v1330
  %v1343 = vmul.f32 %v1342, %v1330
  %v1344 = vmul.f32 %v1343, %v1342
  %v1345 = vmul.f32 0.5, %v1344
  %v1346 = vsub.f32 1.5, %v1345
  %v1347 = vmul.f32 %v1342, %v1346
  %vm1348 = vweird.f32 %v1330
  %vm1349 = vweird.f32 %v1342
  %vm1350 = vmor %vm1348, %vm1349
  %v1351 = vsel %vm1350, %v1342, %v1347
  %v1352 = vrsqrt.pop %v1331
  %v1353 = vmul.f32 %v1352, %v1331
  %v1354 = vmul.f32 %v1353, %v1352
  %v1355 = vmul.f32 0.5, %v1354
  %v1356 = vsub.f32 1.5, %v1355
  %v1357 = vmul.f32 %v1352, %v1356
  %vm1358 = vweird.f32 %v1331
  %vm1359 = vweird.f32 %v1352
  %vm1360 = vmor %vm1358, %vm1359
  %v1361 = vsel %vm1360, %v1352, %v1357
  %v1362 = vmul.f32 %v1323, %v1341
  %v1363 = vmul.f32 %v1324, %v1351
  %v1364 = vmul.f32 %v1325, %v1361
  %v1365 = vsub.f32 0.0, %v1362
  %v1366 = vsub.f32 0.0, %v1363
  %v1367 = vsub.f32 0.0, %v1364
  %1371 = vrot.lane.b32.xlu0 %v1365, 1
  %v1372 = vpop.permute.xlu0 %1371
  %1373 = vrot.lane.b32.xlu0 %v1366, 1
  %v1374 = vpop.permute.xlu0 %1373
  %1375 = vrot.lane.b32.xlu0 %v1367, 1
  %v1376 = vpop.permute.xlu0 %1375
  %v1380 = vsel %vm46, %v1362, %v1372
  %v1381 = vsel %vm46, %v1363, %v1374
  %v1382 = vsel %vm46, %v1364, %v1376
  %v1383 = vperm.slane %v1306, 0
  %v1384 = vmul.f32 %v1380, %v1383
  %v1385 = vmul.f32 %v1381, %v1383
  %v1386 = vmul.f32 %v1382, %v1383
  %v1387 = vperm.slane %v1307, 0
  %v1388 = vadd.f32 %v1384, %v1387
  %v1389 = vadd.f32 %v1385, %v1387
  %v1390 = vadd.f32 %v1386, %v1387
  %v1391 = vld [vmem:[%s2 + $0xa] sm:$0x3]
  %v1392 = vld [vmem:[%s2 + $0x1c] sm:$0x1]
  %1394 = vset.pattern.permute.xlu0 0
  %1395 = vperm.xlu0 %1394, %v1388
  %v1396 = vpop.permute.xlu0 %1395
  %1399 = vset.pattern.permute.xlu0 0
  %1400 = vperm.xlu0 %1399, %v1389
  %v1401 = vpop.permute.xlu0 %1400
  %1404 = vset.pattern.permute.xlu0 0
  %1405 = vperm.xlu0 %1404, %v1390
  %v1406 = vpop.permute.xlu0 %1405
  %v1408 = vperm.slane %v1391, 0
  %v1409 = vmul.f32 %v1396, %v1408
  %v1410 = vmul.f32 %v1401, %v1408
  %v1411 = vmul.f32 %v1406, %v1408
  %v1412 = vperm.slane %v1392, 0
  %v1413 = vadd.f32 %v1412, %v1409
  %v1414 = vadd.f32 %v1412, %v1410
  %v1415 = vadd.f32 %v1412, %v1411
  %1416 = vset.pattern.permute.xlu0 1
  %1417 = vperm.xlu0 %1416, %v1388
  %v1418 = vpop.permute.xlu0 %1417
  %1420 = vset.pattern.permute.xlu0 1
  %1421 = vperm.xlu0 %1420, %v1389
  %v1422 = vpop.permute.xlu0 %1421
  %1424 = vset.pattern.permute.xlu0 1
  %1425 = vperm.xlu0 %1424, %v1390
  %v1426 = vpop.permute.xlu0 %1425
  %v1428 = vperm.slane %v1391, 1
  %v1429 = vmul.f32 %v1418, %v1428
  %v1430 = vmul.f32 %v1422, %v1428
  %v1431 = vmul.f32 %v1426, %v1428
  %v1432 = vadd.f32 %v1413, %v1429
  %v1433 = vadd.f32 %v1414, %v1430
  %v1434 = vadd.f32 %v1415, %v1431
  %v1435 = vmax.f32 %v1432, 0.0
  %v1436 = vmax.f32 %v1433, 0.0
  %v1437 = vmax.f32 %v1434, 0.0
  %v1438 = vld [vmem:[%s2] sm:$0xff]
  %v1439 = vld [vmem:[%s2 + $0x1d] sm:$0x1]
  %1441 = vset.pattern.permute.xlu0 0
  %1442 = vperm.xlu0 %1441, %v1435
  %v1443 = vpop.permute.xlu0 %1442
  %1446 = vset.pattern.permute.xlu0 0
  %1447 = vperm.xlu0 %1446, %v1436
  %v1448 = vpop.permute.xlu0 %1447
  %1451 = vset.pattern.permute.xlu0 0
  %1452 = vperm.xlu0 %1451, %v1437
  %v1453 = vpop.permute.xlu0 %1452
  %v1455 = vperm.slane %v1438, 0
  %v1456 = vmul.f32 %v1443, %v1455
  %v1457 = vmul.f32 %v1448, %v1455
  %v1458 = vmul.f32 %v1453, %v1455
  %v1459 = vperm.slane %v1439, 0
  %v1460 = vadd.f32 %v1459, %v1456
  %v1461 = vadd.f32 %v1459, %v1457
  %v1462 = vadd.f32 %v1459, %v1458
  %1463 = vset.pattern.permute.xlu0 1
  %1464 = vperm.xlu0 %1463, %v1435
  %v1465 = vpop.permute.xlu0 %1464
  %1467 = vset.pattern.permute.xlu0 1
  %1468 = vperm.xlu0 %1467, %v1436
  %v1469 = vpop.permute.xlu0 %1468
  %1471 = vset.pattern.permute.xlu0 1
  %1472 = vperm.xlu0 %1471, %v1437
  %v1473 = vpop.permute.xlu0 %1472
  %v1475 = vperm.slane %v1438, 1
  %v1476 = vmul.f32 %v1465, %v1475
  %v1477 = vmul.f32 %v1469, %v1475
  %v1478 = vmul.f32 %v1473, %v1475
  %v1479 = vadd.f32 %v1460, %v1476
  %v1480 = vadd.f32 %v1461, %v1477
  %v1481 = vadd.f32 %v1462, %v1478
  %1482 = vset.pattern.permute.xlu0 2
  %1483 = vperm.xlu0 %1482, %v1435
  %v1484 = vpop.permute.xlu0 %1483
  %1486 = vset.pattern.permute.xlu0 2
  %1487 = vperm.xlu0 %1486, %v1436
  %v1488 = vpop.permute.xlu0 %1487
  %1490 = vset.pattern.permute.xlu0 2
  %1491 = vperm.xlu0 %1490, %v1437
  %v1492 = vpop.permute.xlu0 %1491
  %v1494 = vperm.slane %v1438, 2
  %v1495 = vmul.f32 %v1484, %v1494
  %v1496 = vmul.f32 %v1488, %v1494
  %v1497 = vmul.f32 %v1492, %v1494
  %v1498 = vadd.f32 %v1479, %v1495
  %v1499 = vadd.f32 %v1480, %v1496
  %v1500 = vadd.f32 %v1481, %v1497
  %1501 = vset.pattern.permute.xlu0 3
  %1502 = vperm.xlu0 %1501, %v1435
  %v1503 = vpop.permute.xlu0 %1502
  %1505 = vset.pattern.permute.xlu0 3
  %1506 = vperm.xlu0 %1505, %v1436
  %v1507 = vpop.permute.xlu0 %1506
  %1509 = vset.pattern.permute.xlu0 3
  %1510 = vperm.xlu0 %1509, %v1437
  %v1511 = vpop.permute.xlu0 %1510
  %v1513 = vperm.slane %v1438, 3
  %v1514 = vmul.f32 %v1503, %v1513
  %v1515 = vmul.f32 %v1507, %v1513
  %v1516 = vmul.f32 %v1511, %v1513
  %v1517 = vadd.f32 %v1498, %v1514
  %v1518 = vadd.f32 %v1499, %v1515
  %v1519 = vadd.f32 %v1500, %v1516
  %1520 = vset.pattern.permute.xlu0 4
  %1521 = vperm.xlu0 %1520, %v1435
  %v1522 = vpop.permute.xlu0 %1521
  %1524 = vset.pattern.permute.xlu0 4
  %1525 = vperm.xlu0 %1524, %v1436
  %v1526 = vpop.permute.xlu0 %1525
  %1528 = vset.pattern.permute.xlu0 4
  %1529 = vperm.xlu0 %1528, %v1437
  %v1530 = vpop.permute.xlu0 %1529
  %v1532 = vperm.slane %v1438, 4
  %v1533 = vmul.f32 %v1522, %v1532
  %v1534 = vmul.f32 %v1526, %v1532
  %v1535 = vmul.f32 %v1530, %v1532
  %v1536 = vadd.f32 %v1517, %v1533
  %v1537 = vadd.f32 %v1518, %v1534
  %v1538 = vadd.f32 %v1519, %v1535
  %1539 = vset.pattern.permute.xlu0 5
  %1540 = vperm.xlu0 %1539, %v1435
  %v1541 = vpop.permute.xlu0 %1540
  %1543 = vset.pattern.permute.xlu0 5
  %1544 = vperm.xlu0 %1543, %v1436
  %v1545 = vpop.permute.xlu0 %1544
  %1547 = vset.pattern.permute.xlu0 5
  %1548 = vperm.xlu0 %1547, %v1437
  %v1549 = vpop.permute.xlu0 %1548
  %v1551 = vperm.slane %v1438, 5
  %v1552 = vmul.f32 %v1541, %v1551
  %v1553 = vmul.f32 %v1545, %v1551
  %v1554 = vmul.f32 %v1549, %v1551
  %v1555 = vadd.f32 %v1536, %v1552
  %v1556 = vadd.f32 %v1537, %v1553
  %v1557 = vadd.f32 %v1538, %v1554
  %1558 = vset.pattern.permute.xlu0 6
  %1559 = vperm.xlu0 %1558, %v1435
  %v1560 = vpop.permute.xlu0 %1559
  %1562 = vset.pattern.permute.xlu0 6
  %1563 = vperm.xlu0 %1562, %v1436
  %v1564 = vpop.permute.xlu0 %1563
  %1566 = vset.pattern.permute.xlu0 6
  %1567 = vperm.xlu0 %1566, %v1437
  %v1568 = vpop.permute.xlu0 %1567
  %v1570 = vperm.slane %v1438, 6
  %v1571 = vmul.f32 %v1560, %v1570
  %v1572 = vmul.f32 %v1564, %v1570
  %v1573 = vmul.f32 %v1568, %v1570
  %v1574 = vadd.f32 %v1555, %v1571
  %v1575 = vadd.f32 %v1556, %v1572
  %v1576 = vadd.f32 %v1557, %v1573
  %1577 = vset.pattern.permute.xlu0 7
  %1578 = vperm.xlu0 %1577, %v1435
  %v1579 = vpop.permute.xlu0 %1578
  %1581 = vset.pattern.permute.xlu0 7
  %1582 = vperm.xlu0 %1581, %v1436
  %v1583 = vpop.permute.xlu0 %1582
  %1585 = vset.pattern.permute.xlu0 7
  %1586 = vperm.xlu0 %1585, %v1437
  %v1587 = vpop.permute.xlu0 %1586
  %v1589 = vperm.slane %v1438, 7
  %v1590 = vmul.f32 %v1579, %v1589
  %v1591 = vmul.f32 %v1583, %v1589
  %v1592 = vmul.f32 %v1587, %v1589
  %v1593 = vadd.f32 %v1574, %v1590
  %v1594 = vadd.f32 %v1575, %v1591
  %v1595 = vadd.f32 %v1576, %v1592
  %1596 = vrot.lane.b32.xlu0 %v14, 104
  %v1597 = vpop.permute.xlu0 %1596
  %1598 = vrot.lane.b32.xlu0 %v15, 104
  %v1599 = vpop.permute.xlu0 %1598
  %1600 = vrot.lane.b32.xlu0 %v16, 104
  %v1601 = vpop.permute.xlu0 %1600
  %v1605 = vadd.f32 %v1593, %v1597
  %v1606 = vadd.f32 %v1594, %v1599
  %v1607 = vadd.f32 %v1595, %v1601
  %v1608 = vmax.f32 %v1605, 0.0
  %v1609 = vmax.f32 %v1606, 0.0
  %v1610 = vmax.f32 %v1607, 0.0
  %v1611 = vld [vmem:[%s2 + $0xc] sm:$0x3]
  %v1612 = vld [vmem:[%s2 + $0x1e] sm:$0x1]
  %v1613 = vperm.slane %v1611, 0
  %v1614 = vmul.f32 %v1608, %v1613
  %v1615 = vmul.f32 %v1609, %v1613
  %v1616 = vmul.f32 %v1610, %v1613
  %vm1617 = vcmask 64512
  %v1618 = vsel %vm1617, %v1614, 0.0
  %1619 = vadd.xlane.f32.xlu0 %v1618
  %v1620 = vpop.xlane.xlu0 %1619
  %v1621 = vsel %vm1617, %v1615, 0.0
  %1622 = vadd.xlane.f32.xlu0 %v1621
  %v1623 = vpop.xlane.xlu0 %1622
  %vm1624 = vcmask 58368
  %v1625 = vsel %vm1624, %v1616, 0.0
  %1626 = vadd.xlane.f32.xlu0 %v1625
  %v1627 = vpop.xlane.xlu0 %1626
  %v1628 = vperm.slane %v1611, 1
  %v1629 = vmul.f32 %v1608, %v1628
  %v1630 = vmul.f32 %v1609, %v1628
  %v1631 = vmul.f32 %v1610, %v1628
  %v1632 = vsel %vm1617, %v1629, 0.0
  %1633 = vadd.xlane.f32.xlu0 %v1632
  %v1634 = vpop.xlane.xlu0 %1633
  %v1635 = vsel %vm1617, %v1630, 0.0
  %1636 = vadd.xlane.f32.xlu0 %v1635
  %v1637 = vpop.xlane.xlu0 %1636
  %v1638 = vsel %vm1624, %v1631, 0.0
  %1639 = vadd.xlane.f32.xlu0 %v1638
  %v1640 = vpop.xlane.xlu0 %1639
  %v1641 = vsel %vm46, %v1620, %v1634
  %v1642 = vsel %vm46, %v1623, %v1637
  %v1643 = vsel %vm46, %v1627, %v1640
  %v1644 = vperm.slane %v1612, 0
  %v1645 = vadd.f32 %v1641, %v1644
  %v1646 = vadd.f32 %v1642, %v1644
  %v1647 = vadd.f32 %v1643, %v1644
  %vm1648 = vcmask 15360
  %1649 = vst.msk [vmem:[%s3] sm:$0xff] %vm1648, %v1645
  %1650 = vst.msk [vmem:[%s3 + $0x8] sm:$0xff] %vm1648, %v1646
  %vm1651 = vcmask 9216
  %1652 = vst.msk [vmem:[%s3 + $0x10] sm:$0x3] %vm1651, %v1647
  // Predicated region
  $region14: #{weather_predictor_forward.1} parent=0 // pred_check
    _
  $region15: #{weather_predictor_forward.1} parent=0 // pred_check_branch
    %1654 = sbr.rel (0) target = $region17
  $region16: #{weather_predictor_forward.1} parent=0 // pred_region
    _
  $region17: #{weather_predictor_forward.1} parent=0 // pred_fallthru
    _
  // Predicated region
  $region18: #{weather_predictor_forward.1} parent=0 // pred_check
    _
  $region19: #{weather_predictor_forward.1} parent=0 // pred_check_branch
    %1656 = sbr.rel (0) target = $region21
  $region20: #{weather_predictor_forward.1} parent=0 // pred_region
    _
  $region21: #{weather_predictor_forward.1} parent=0 // pred_fallthru
    _

</llo_original>
